<compile_context>
chip_gen: v6e
topology: v6e:2x2x1
jax: 0.10.0
libtpu: 0.0.40
codegen_flags: <defaults>
</compile_context>

<pallas_src>
import jax
import jax.numpy as jnp
from jax.experimental import pallas as pl
from jax.experimental.pallas import tpu as pltpu

NUM_FEATURE = 4       # ['open', 'high', 'low', 'close']
HIDDEN = 32
NUM_LAYERS = 2
NUM_PRED_DAY = 1
TILE_B = 8            # f32 sublane count; batch rows per grid point


def lstm_kernel(x_ref,
                wih0_ref, whh0_ref, b0_ref,
                w1_ref, b1_ref,
                wfc_ref, bfc_ref,
                out_ref):
    """Wavefronted 2-layer LSTM + linear head for one batch tile.

    x_ref:    (S, TB, F) f32  time-major batch tile
    wih0_ref: (F, 4H) bf16    whh0_ref: (H, 4H) bf16    b0_ref: (1, 4H) f32
    w1_ref:   (2H, 4H) bf16   stacked [W_ih1; W_hh1]    b1_ref: (1, 4H) f32
      (g-gate columns of every weight/bias are pre-scaled by 2)
    wfc_ref:  (H, 1) f32      bfc_ref: (1, 1) f32
    out_ref:  (TB, 1) f32
    """
    S, TB, _ = x_ref.shape
    H = whh0_ref.shape[0]

    whh0 = whh0_ref[...]
    wih0 = wih0_ref[...]
    w1 = w1_ref[...]
    # Hoisted broadcasts (JAX does not CSE broadcast_in_dim inside loops).
    b0 = jnp.broadcast_to(b0_ref[...], (TB, 4 * H))
    b1 = jnp.broadcast_to(b1_ref[...], (TB, 4 * H))

    # Layer-0 input projections depend only on x, so they sit OFF the
    # recurrence critical path; the scheduler overlaps them with the chain.
    xg0 = [jnp.dot(x_ref[t].astype(jnp.bfloat16), wih0,
                   preferred_element_type=jnp.float32) + b0
           for t in range(S)]

    def cell(pre, c):
        # pre: (TB, 4H) gate pre-activations with g columns already doubled.
        # One full-128-lane sigmoid; tanh(g) recovered as 2*sigmoid(2g) - 1
        # (exact identity) on the VALU instead of a second dependent EUP op.
        sig = jax.nn.sigmoid(pre)
        i_g = sig[:, 0:H]
        f_g = sig[:, H:2 * H]
        g_t = 2.0 * sig[:, 2 * H:3 * H] - 1.0
        o_g = sig[:, 3 * H:4 * H]
        c_new = f_g * c + i_g * g_t
        h_new = o_g * jnp.tanh(c_new)
        return h_new, c_new

    zeros = jnp.zeros((TB, H), jnp.float32)
    h0, c0 = zeros, zeros
    h1, c1 = zeros, zeros

    # Wavefront: iteration t runs layer-0 cell t and layer-1 cell t-1, which
    # are independent -> dependence chain is S+1 cells instead of 2S.
    for t in range(S + 1):
        h0_prev = h0                         # = h0_{t-1}, feeds layer-1 cell t-1
        if t < S:
            # Exactly one MXU matmul on the layer-0 chain.
            pre0 = jnp.dot(h0.astype(jnp.bfloat16), whh0,
                           preferred_element_type=jnp.float32) + xg0[t]
            h0, c0 = cell(pre0, c0)
        if t > 0:
            # Fused input+hidden projection: one MXU issue + one result pop.
            lhs1 = jnp.concatenate([h0_prev, h1], axis=1).astype(jnp.bfloat16)
            pre1 = jnp.dot(lhs1, w1, preferred_element_type=jnp.float32) + b1
            h1, c1 = cell(pre1, c1)

    # fc(h_n[layer 1]) -> (TB, 1), kept f32 (tiny).
    out_ref[...] = (jnp.dot(h1, wfc_ref[...], preferred_element_type=jnp.float32)
                    + bfc_ref[...])


def lstm_forward(x, kparams, tile_b=TILE_B):
    """x: (B, S, F) f32, kparams from prepare_kernel_params. Returns (B, 1)."""
    B, S, F = x.shape
    B_pad = ((B + tile_b - 1) // tile_b) * tile_b
    # Pad the batch to a multiple of the 8-row sublane tile (occupancy), then
    # go time-major so each grid point gets a contiguous (S, tile_b, F) slab.
    x_p = jnp.pad(x, ((0, B_pad - B), (0, 0), (0, 0)))
    x_t = jnp.transpose(x_p, (1, 0, 2))                  # (S, B_pad, F)

    def full_spec(arr):
        return pl.BlockSpec(arr.shape, lambda b: (0,) * arr.ndim)

    out = pl.pallas_call(
        lstm_kernel,
        out_shape=jax.ShapeDtypeStruct((B_pad, NUM_PRED_DAY), jnp.float32),
        grid=(B_pad // tile_b,),
        in_specs=[pl.BlockSpec((S, tile_b, F), lambda b: (0, b, 0))]
                 + [full_spec(p) for p in kparams],
        out_specs=pl.BlockSpec((tile_b, NUM_PRED_DAY), lambda b: (b, 0)),
        # Batch tiles are independent -> "parallel" shards them across both
        # v7x TensorCores (near no-op on single-TC v5e/v6e).
        compiler_params=pltpu.CompilerParams(
            dimension_semantics=("parallel",)),
    )(x_t, *kparams)
    return out[:B]


def init_params(key):
    """Raw PyTorch-shaped f32 parameters, U(-1/sqrt(H), 1/sqrt(H)) init."""
    k = 1.0 / jnp.sqrt(jnp.float32(HIDDEN))
    keys = jax.random.split(key, 10)

    def u(kk, shape):
        return jax.random.uniform(kk, shape, jnp.float32, -k, k)

    w_ih0 = u(keys[0], (4 * HIDDEN, NUM_FEATURE))
    w_hh0 = u(keys[1], (4 * HIDDEN, HIDDEN))
    b_ih0 = u(keys[2], (4 * HIDDEN,))
    b_hh0 = u(keys[3], (4 * HIDDEN,))
    w_ih1 = u(keys[4], (4 * HIDDEN, HIDDEN))
    w_hh1 = u(keys[5], (4 * HIDDEN, HIDDEN))
    b_ih1 = u(keys[6], (4 * HIDDEN,))
    b_hh1 = u(keys[7], (4 * HIDDEN,))
    w_fc = u(keys[8], (NUM_PRED_DAY, HIDDEN))
    b_fc = u(keys[9], (NUM_PRED_DAY,))
    return (w_ih0, w_hh0, b_ih0, b_hh0,
            w_ih1, w_hh1, b_ih1, b_hh1, w_fc, b_fc)


def prepare_kernel_params(raw):
    """Transpose, fold biases, 2x-scale the g-gate columns (tanh-via-sigmoid),
    stack layer-1's [W_ih1; W_hh1], and cast matmul weights to bf16."""
    (w_ih0, w_hh0, b_ih0, b_hh0,
     w_ih1, w_hh1, b_ih1, b_hh1, w_fc, b_fc) = raw
    H = HIDDEN
    bf16 = jnp.bfloat16

    def gscale_rows(w):   # PyTorch layout (4H, K): g rows are 2H:3H
        return w.at[2 * H:3 * H, :].multiply(2.0)

    def gscale_vec(b):
        return b.at[2 * H:3 * H].multiply(2.0)

    w_ih0s, w_hh0s = gscale_rows(w_ih0), gscale_rows(w_hh0)
    w_ih1s, w_hh1s = gscale_rows(w_ih1), gscale_rows(w_hh1)
    b0 = gscale_vec(b_ih0 + b_hh0)
    b1 = gscale_vec(b_ih1 + b_hh1)

    w1_fused = jnp.concatenate([w_ih1s.T, w_hh1s.T], axis=0)   # (2H, 4H)

    return (
        w_ih0s.T.astype(bf16),                              # (F, 4H)
        w_hh0s.T.astype(bf16),                              # (H, 4H)
        b0.reshape(1, 4 * H).astype(jnp.float32),           # (1, 4H)
        w1_fused.astype(bf16),                              # (2H, 4H)
        b1.reshape(1, 4 * H).astype(jnp.float32),           # (1, 4H)
        w_fc.T.astype(jnp.float32),                         # (H, 1)
        b_fc.reshape(1, NUM_PRED_DAY).astype(jnp.float32),  # (1, 1)
    )


def reference_forward(x, raw, matmul_dtype=jnp.float32):
    """Pure-JAX reference (PyTorch nn.LSTM semantics).

    matmul_dtype=float32  -> exact module semantics.
    matmul_dtype=bfloat16 -> mirrors the kernel's bf16-operand matmuls.
    """
    (w_ih0, w_hh0, b_ih0, b_hh0,
     w_ih1, w_hh1, b_ih1, b_hh1, w_fc, b_fc) = raw
    B, S, _ = x.shape
    H = HIDDEN

    def mm(a, b):
        return jnp.dot(a.astype(matmul_dtype), b.astype(matmul_dtype),
                       preferred_element_type=jnp.float32)

    def cell(x_t, h, c, wih, whh, b):
        g = mm(x_t, wih.T) + mm(h, whh.T) + b
        i = jax.nn.sigmoid(g[:, 0:H]); f = jax.nn.sigmoid(g[:, H:2 * H])
        gg = jnp.tanh(g[:, 2 * H:3 * H]); o = jax.nn.sigmoid(g[:, 3 * H:4 * H])
        c = f * c + i * gg
        return o * jnp.tanh(c), c

    b0 = (b_ih0 + b_hh0)[None, :]
    b1 = (b_ih1 + b_hh1)[None, :]
    h0 = jnp.zeros((B, H), jnp.float32); c0 = jnp.zeros((B, H), jnp.float32)
    h1 = jnp.zeros((B, H), jnp.float32); c1 = jnp.zeros((B, H), jnp.float32)
    for t in range(S):
        h0, c0 = cell(x[:, t, :], h0, c0, w_ih0, w_hh0, b0)
        h1, c1 = cell(h0, h1, c1, w_ih1, w_hh1, b1)
    return h1 @ w_fc.T + b_fc[None, :]


if __name__ == "__main__":
    key = jax.random.PRNGKey(0)
    k_x, k_p, k_x2 = jax.random.split(key, 3)

    batch, seq = 2, 8
    x = jax.random.normal(k_x, (batch, seq, NUM_FEATURE), jnp.float32)
    raw = init_params(k_p)
    kparams = prepare_kernel_params(raw)

    out = jax.block_until_ready(lstm_forward(x, kparams))
    assert out.shape == (batch, NUM_PRED_DAY)

    # Tight check against a reference mirroring the kernel's bf16 matmul
    # operands (f32 accumulation and f32 gate math in both).
    ref_bf16 = reference_forward(x, raw, jnp.bfloat16)
    assert jnp.allclose(out, ref_bf16, atol=1e-3, rtol=1e-3)

    # Semantics check against the pure-f32 PyTorch-equivalent reference;
    # tolerance relaxed because matmul operands are bf16 in the kernel.
    ref_f32 = reference_forward(x, raw, jnp.float32)
    assert jnp.allclose(out, ref_f32, atol=3e-2, rtol=3e-2)

    # Exercise the batch-tiled "parallel" grid path (4 tiles of 8 rows).
    x_big = jax.random.normal(k_x2, (32, seq, NUM_FEATURE), jnp.float32)
    out_big = jax.block_until_ready(lstm_forward(x_big, kparams))
    assert out_big.shape == (32, NUM_PRED_DAY)
    ref_big = reference_forward(x_big, raw, jnp.bfloat16)
    assert jnp.allclose(out_big, ref_big, atol=1e-3, rtol=1e-3)

    print("KERNEL_OK")
</pallas_src>

<mosaic_0001>
module attributes {stable_mosaic.version = 11 : i64} {
  func.func @lstm_kernel(%arg0: i32, %arg1: memref<8x8x4xf32, #tpu.memory_space<vmem>>, %arg2: memref<4x128xbf16, #tpu.memory_space<vmem>>, %arg3: memref<32x128xbf16, #tpu.memory_space<vmem>>, %arg4: memref<1x128xf32, #tpu.memory_space<vmem>>, %arg5: memref<64x128xbf16, #tpu.memory_space<vmem>>, %arg6: memref<1x128xf32, #tpu.memory_space<vmem>>, %arg7: memref<32x1xf32, #tpu.memory_space<vmem>>, %arg8: memref<1x1xf32, #tpu.memory_space<vmem>>, %arg9: memref<8x1xf32, #tpu.memory_space<vmem>>) attributes {dimension_semantics = [#tpu.dimension_semantics<parallel>], iteration_bounds = array<i64: 1>, scalar_prefetch = 0 : i64, scratch_operands = 0 : i64, tpu.core_type = #tpu.core_type<tc>, window_params = [{transform_indices = @transform_0, window_bounds = array<i64: 8, 8, 4>}, {pipeline_mode = #tpu.pipeline_mode<synchronous>, transform_indices = @transform_1, window_bounds = array<i64: 4, 128>}, {pipeline_mode = #tpu.pipeline_mode<synchronous>, transform_indices = @transform_2, window_bounds = array<i64: 32, 128>}, {pipeline_mode = #tpu.pipeline_mode<synchronous>, transform_indices = @transform_3, window_bounds = array<i64: 1, 128>}, {pipeline_mode = #tpu.pipeline_mode<synchronous>, transform_indices = @transform_4, window_bounds = array<i64: 64, 128>}, {pipeline_mode = #tpu.pipeline_mode<synchronous>, transform_indices = @transform_5, window_bounds = array<i64: 1, 128>}, {pipeline_mode = #tpu.pipeline_mode<synchronous>, transform_indices = @transform_6, window_bounds = array<i64: 32, 1>}, {pipeline_mode = #tpu.pipeline_mode<synchronous>, transform_indices = @transform_7, window_bounds = array<i64: 1, 1>}, {transform_indices = @transform_8, window_bounds = array<i64: 8, 1>}]} {
    %c0 = arith.constant 0 : index
    %c0_0 = arith.constant 0 : index
    %0 = vector.load %arg3[%c0, %c0_0] : memref<32x128xbf16, #tpu.memory_space<vmem>>, vector<32x128xbf16>
    %c0_1 = arith.constant 0 : index
    %c0_2 = arith.constant 0 : index
    %1 = vector.load %arg2[%c0_1, %c0_2] : memref<4x128xbf16, #tpu.memory_space<vmem>>, vector<4x128xbf16>
    %c0_3 = arith.constant 0 : index
    %c0_4 = arith.constant 0 : index
    %2 = vector.load %arg5[%c0_3, %c0_4] : memref<64x128xbf16, #tpu.memory_space<vmem>>, vector<64x128xbf16>
    %c0_5 = arith.constant 0 : index
    %c0_6 = arith.constant 0 : index
    %3 = vector.load %arg4[%c0_5, %c0_6] : memref<1x128xf32, #tpu.memory_space<vmem>>, vector<1x128xf32>
    %4 = vector.shape_cast %3 : vector<1x128xf32> to vector<1x128xf32>
    %5 = vector.broadcast %4 : vector<1x128xf32> to vector<8x128xf32>
    %c0_7 = arith.constant 0 : index
    %c0_8 = arith.constant 0 : index
    %6 = vector.load %arg6[%c0_7, %c0_8] : memref<1x128xf32, #tpu.memory_space<vmem>>, vector<1x128xf32>
    %7 = vector.shape_cast %6 : vector<1x128xf32> to vector<1x128xf32>
    %8 = vector.broadcast %7 : vector<1x128xf32> to vector<8x128xf32>
    %c0_9 = arith.constant 0 : index
    %c0_10 = arith.constant 0 : index
    %c0_11 = arith.constant 0 : index
    %9 = vector.load %arg1[%c0_9, %c0_10, %c0_11] : memref<8x8x4xf32, #tpu.memory_space<vmem>>, vector<1x8x4xf32>
    %10 = vector.shape_cast %9 : vector<1x8x4xf32> to vector<8x4xf32>
    %11 = arith.truncf %10 : vector<8x4xf32> to vector<8x4xbf16>
    %cst = arith.constant dense<0.000000e+00> : vector<8x128xf32>
    %12 = tpu.matmul %11, %1, %cst {dimension_numbers = #tpu.dot_dimension_numbers<[1], [0], [0], [1], [0, 0, 1, 1], [], []>} : vector<8x4xbf16>, vector<4x128xbf16>, vector<8x128xf32> -> vector<8x128xf32>
    %13 = arith.addf %12, %5 : vector<8x128xf32>
    %c1 = arith.constant 1 : index
    %c0_12 = arith.constant 0 : index
    %c0_13 = arith.constant 0 : index
    %14 = vector.load %arg1[%c1, %c0_12, %c0_13] : memref<8x8x4xf32, #tpu.memory_space<vmem>>, vector<1x8x4xf32>
    %15 = vector.shape_cast %14 : vector<1x8x4xf32> to vector<8x4xf32>
    %16 = arith.truncf %15 : vector<8x4xf32> to vector<8x4xbf16>
    %cst_14 = arith.constant dense<0.000000e+00> : vector<8x128xf32>
    %17 = tpu.matmul %16, %1, %cst_14 {dimension_numbers = #tpu.dot_dimension_numbers<[1], [0], [0], [1], [0, 0, 1, 1], [], []>} : vector<8x4xbf16>, vector<4x128xbf16>, vector<8x128xf32> -> vector<8x128xf32>
    %18 = arith.addf %17, %5 : vector<8x128xf32>
    %c2 = arith.constant 2 : index
    %c0_15 = arith.constant 0 : index
    %c0_16 = arith.constant 0 : index
    %19 = vector.load %arg1[%c2, %c0_15, %c0_16] : memref<8x8x4xf32, #tpu.memory_space<vmem>>, vector<1x8x4xf32>
    %20 = vector.shape_cast %19 : vector<1x8x4xf32> to vector<8x4xf32>
    %21 = arith.truncf %20 : vector<8x4xf32> to vector<8x4xbf16>
    %cst_17 = arith.constant dense<0.000000e+00> : vector<8x128xf32>
    %22 = tpu.matmul %21, %1, %cst_17 {dimension_numbers = #tpu.dot_dimension_numbers<[1], [0], [0], [1], [0, 0, 1, 1], [], []>} : vector<8x4xbf16>, vector<4x128xbf16>, vector<8x128xf32> -> vector<8x128xf32>
    %23 = arith.addf %22, %5 : vector<8x128xf32>
    %c3 = arith.constant 3 : index
    %c0_18 = arith.constant 0 : index
    %c0_19 = arith.constant 0 : index
    %24 = vector.load %arg1[%c3, %c0_18, %c0_19] : memref<8x8x4xf32, #tpu.memory_space<vmem>>, vector<1x8x4xf32>
    %25 = vector.shape_cast %24 : vector<1x8x4xf32> to vector<8x4xf32>
    %26 = arith.truncf %25 : vector<8x4xf32> to vector<8x4xbf16>
    %cst_20 = arith.constant dense<0.000000e+00> : vector<8x128xf32>
    %27 = tpu.matmul %26, %1, %cst_20 {dimension_numbers = #tpu.dot_dimension_numbers<[1], [0], [0], [1], [0, 0, 1, 1], [], []>} : vector<8x4xbf16>, vector<4x128xbf16>, vector<8x128xf32> -> vector<8x128xf32>
    %28 = arith.addf %27, %5 : vector<8x128xf32>
    %c4 = arith.constant 4 : index
    %c0_21 = arith.constant 0 : index
    %c0_22 = arith.constant 0 : index
    %29 = vector.load %arg1[%c4, %c0_21, %c0_22] : memref<8x8x4xf32, #tpu.memory_space<vmem>>, vector<1x8x4xf32>
    %30 = vector.shape_cast %29 : vector<1x8x4xf32> to vector<8x4xf32>
    %31 = arith.truncf %30 : vector<8x4xf32> to vector<8x4xbf16>
    %cst_23 = arith.constant dense<0.000000e+00> : vector<8x128xf32>
    %32 = tpu.matmul %31, %1, %cst_23 {dimension_numbers = #tpu.dot_dimension_numbers<[1], [0], [0], [1], [0, 0, 1, 1], [], []>} : vector<8x4xbf16>, vector<4x128xbf16>, vector<8x128xf32> -> vector<8x128xf32>
    %33 = arith.addf %32, %5 : vector<8x128xf32>
    %c5 = arith.constant 5 : index
    %c0_24 = arith.constant 0 : index
    %c0_25 = arith.constant 0 : index
    %34 = vector.load %arg1[%c5, %c0_24, %c0_25] : memref<8x8x4xf32, #tpu.memory_space<vmem>>, vector<1x8x4xf32>
    %35 = vector.shape_cast %34 : vector<1x8x4xf32> to vector<8x4xf32>
    %36 = arith.truncf %35 : vector<8x4xf32> to vector<8x4xbf16>
    %cst_26 = arith.constant dense<0.000000e+00> : vector<8x128xf32>
    %37 = tpu.matmul %36, %1, %cst_26 {dimension_numbers = #tpu.dot_dimension_numbers<[1], [0], [0], [1], [0, 0, 1, 1], [], []>} : vector<8x4xbf16>, vector<4x128xbf16>, vector<8x128xf32> -> vector<8x128xf32>
    %38 = arith.addf %37, %5 : vector<8x128xf32>
    %c6 = arith.constant 6 : index
    %c0_27 = arith.constant 0 : index
    %c0_28 = arith.constant 0 : index
    %39 = vector.load %arg1[%c6, %c0_27, %c0_28] : memref<8x8x4xf32, #tpu.memory_space<vmem>>, vector<1x8x4xf32>
    %40 = vector.shape_cast %39 : vector<1x8x4xf32> to vector<8x4xf32>
    %41 = arith.truncf %40 : vector<8x4xf32> to vector<8x4xbf16>
    %cst_29 = arith.constant dense<0.000000e+00> : vector<8x128xf32>
    %42 = tpu.matmul %41, %1, %cst_29 {dimension_numbers = #tpu.dot_dimension_numbers<[1], [0], [0], [1], [0, 0, 1, 1], [], []>} : vector<8x4xbf16>, vector<4x128xbf16>, vector<8x128xf32> -> vector<8x128xf32>
    %43 = arith.addf %42, %5 : vector<8x128xf32>
    %c7 = arith.constant 7 : index
    %c0_30 = arith.constant 0 : index
    %c0_31 = arith.constant 0 : index
    %44 = vector.load %arg1[%c7, %c0_30, %c0_31] : memref<8x8x4xf32, #tpu.memory_space<vmem>>, vector<1x8x4xf32>
    %45 = vector.shape_cast %44 : vector<1x8x4xf32> to vector<8x4xf32>
    %46 = arith.truncf %45 : vector<8x4xf32> to vector<8x4xbf16>
    %cst_32 = arith.constant dense<0.000000e+00> : vector<8x128xf32>
    %47 = tpu.matmul %46, %1, %cst_32 {dimension_numbers = #tpu.dot_dimension_numbers<[1], [0], [0], [1], [0, 0, 1, 1], [], []>} : vector<8x4xbf16>, vector<4x128xbf16>, vector<8x128xf32> -> vector<8x128xf32>
    %48 = arith.addf %47, %5 : vector<8x128xf32>
    %cst_33 = arith.constant 0.000000e+00 : f32
    %49 = vector.broadcast %cst_33 : f32 to vector<8x32xf32>
    %50 = arith.truncf %49 : vector<8x32xf32> to vector<8x32xbf16>
    %cst_34 = arith.constant dense<0.000000e+00> : vector<8x128xf32>
    %51 = tpu.matmul %50, %0, %cst_34 {dimension_numbers = #tpu.dot_dimension_numbers<[1], [0], [0], [1], [0, 0, 1, 1], [], []>} : vector<8x32xbf16>, vector<32x128xbf16>, vector<8x128xf32> -> vector<8x128xf32>
    %52 = arith.addf %51, %13 : vector<8x128xf32>
    %53 = arith.negf %52 : vector<8x128xf32>
    %54 = math.exp %53 : vector<8x128xf32>
    %cst_35 = arith.constant 1.000000e+00 : f32
    %55 = vector.broadcast %cst_35 : f32 to vector<8x128xf32>
    %56 = arith.addf %55, %54 : vector<8x128xf32>
    %57 = arith.divf %55, %56 : vector<8x128xf32>
    %58 = vector.extract_strided_slice %57 {offsets = [0, 0], sizes = [8, 32], strides = [1, 1]} : vector<8x128xf32> to vector<8x32xf32>
    %59 = vector.extract_strided_slice %57 {offsets = [0, 32], sizes = [8, 32], strides = [1, 1]} : vector<8x128xf32> to vector<8x32xf32>
    %60 = vector.extract_strided_slice %57 {offsets = [0, 64], sizes = [8, 32], strides = [1, 1]} : vector<8x128xf32> to vector<8x32xf32>
    %cst_36 = arith.constant 2.000000e+00 : f32
    %61 = vector.broadcast %cst_36 : f32 to vector<8x32xf32>
    %62 = arith.mulf %61, %60 : vector<8x32xf32>
    %cst_37 = arith.constant 1.000000e+00 : f32
    %63 = vector.broadcast %cst_37 : f32 to vector<8x32xf32>
    %64 = arith.subf %62, %63 : vector<8x32xf32>
    %65 = vector.extract_strided_slice %57 {offsets = [0, 96], sizes = [8, 32], strides = [1, 1]} : vector<8x128xf32> to vector<8x32xf32>
    %66 = arith.mulf %59, %49 : vector<8x32xf32>
    %67 = arith.mulf %58, %64 : vector<8x32xf32>
    %68 = arith.addf %66, %67 : vector<8x32xf32>
    %69 = math.tanh %68 : vector<8x32xf32>
    %70 = arith.mulf %65, %69 : vector<8x32xf32>
    %71 = arith.truncf %70 : vector<8x32xf32> to vector<8x32xbf16>
    %cst_38 = arith.constant dense<0.000000e+00> : vector<8x128xf32>
    %72 = tpu.matmul %71, %0, %cst_38 {dimension_numbers = #tpu.dot_dimension_numbers<[1], [0], [0], [1], [0, 0, 1, 1], [], []>} : vector<8x32xbf16>, vector<32x128xbf16>, vector<8x128xf32> -> vector<8x128xf32>
    %73 = arith.addf %72, %18 : vector<8x128xf32>
    %74 = arith.negf %73 : vector<8x128xf32>
    %75 = math.exp %74 : vector<8x128xf32>
    %cst_39 = arith.constant 1.000000e+00 : f32
    %76 = vector.broadcast %cst_39 : f32 to vector<8x128xf32>
    %77 = arith.addf %76, %75 : vector<8x128xf32>
    %78 = arith.divf %76, %77 : vector<8x128xf32>
    %79 = vector.extract_strided_slice %78 {offsets = [0, 0], sizes = [8, 32], strides = [1, 1]} : vector<8x128xf32> to vector<8x32xf32>
    %80 = vector.extract_strided_slice %78 {offsets = [0, 32], sizes = [8, 32], strides = [1, 1]} : vector<8x128xf32> to vector<8x32xf32>
    %81 = vector.extract_strided_slice %78 {offsets = [0, 64], sizes = [8, 32], strides = [1, 1]} : vector<8x128xf32> to vector<8x32xf32>
    %cst_40 = arith.constant 2.000000e+00 : f32
    %82 = vector.broadcast %cst_40 : f32 to vector<8x32xf32>
    %83 = arith.mulf %82, %81 : vector<8x32xf32>
    %cst_41 = arith.constant 1.000000e+00 : f32
    %84 = vector.broadcast %cst_41 : f32 to vector<8x32xf32>
    %85 = arith.subf %83, %84 : vector<8x32xf32>
    %86 = vector.extract_strided_slice %78 {offsets = [0, 96], sizes = [8, 32], strides = [1, 1]} : vector<8x128xf32> to vector<8x32xf32>
    %87 = arith.mulf %80, %68 : vector<8x32xf32>
    %88 = arith.mulf %79, %85 : vector<8x32xf32>
    %89 = arith.addf %87, %88 : vector<8x32xf32>
    %90 = math.tanh %89 : vector<8x32xf32>
    %91 = arith.mulf %86, %90 : vector<8x32xf32>
    %92 = tpu.concatenate %70, %49 in 1 : vector<8x32xf32>, vector<8x32xf32> -> vector<8x64xf32>
    %93 = arith.truncf %92 : vector<8x64xf32> to vector<8x64xbf16>
    %cst_42 = arith.constant dense<0.000000e+00> : vector<8x128xf32>
    %94 = tpu.matmul %93, %2, %cst_42 {dimension_numbers = #tpu.dot_dimension_numbers<[1], [0], [0], [1], [0, 0, 1, 1], [], []>} : vector<8x64xbf16>, vector<64x128xbf16>, vector<8x128xf32> -> vector<8x128xf32>
    %95 = arith.addf %94, %8 : vector<8x128xf32>
    %96 = arith.negf %95 : vector<8x128xf32>
    %97 = math.exp %96 : vector<8x128xf32>
    %cst_43 = arith.constant 1.000000e+00 : f32
    %98 = vector.broadcast %cst_43 : f32 to vector<8x128xf32>
    %99 = arith.addf %98, %97 : vector<8x128xf32>
    %100 = arith.divf %98, %99 : vector<8x128xf32>
    %101 = vector.extract_strided_slice %100 {offsets = [0, 0], sizes = [8, 32], strides = [1, 1]} : vector<8x128xf32> to vector<8x32xf32>
    %102 = vector.extract_strided_slice %100 {offsets = [0, 32], sizes = [8, 32], strides = [1, 1]} : vector<8x128xf32> to vector<8x32xf32>
    %103 = vector.extract_strided_slice %100 {offsets = [0, 64], sizes = [8, 32], strides = [1, 1]} : vector<8x128xf32> to vector<8x32xf32>
    %cst_44 = arith.constant 2.000000e+00 : f32
    %104 = vector.broadcast %cst_44 : f32 to vector<8x32xf32>
    %105 = arith.mulf %104, %103 : vector<8x32xf32>
    %cst_45 = arith.constant 1.000000e+00 : f32
    %106 = vector.broadcast %cst_45 : f32 to vector<8x32xf32>
    %107 = arith.subf %105, %106 : vector<8x32xf32>
    %108 = vector.extract_strided_slice %100 {offsets = [0, 96], sizes = [8, 32], strides = [1, 1]} : vector<8x128xf32> to vector<8x32xf32>
    %109 = arith.mulf %102, %49 : vector<8x32xf32>
    %110 = arith.mulf %101, %107 : vector<8x32xf32>
    %111 = arith.addf %109, %110 : vector<8x32xf32>
    %112 = math.tanh %111 : vector<8x32xf32>
    %113 = arith.mulf %108, %112 : vector<8x32xf32>
    %114 = arith.truncf %91 : vector<8x32xf32> to vector<8x32xbf16>
    %cst_46 = arith.constant dense<0.000000e+00> : vector<8x128xf32>
    %115 = tpu.matmul %114, %0, %cst_46 {dimension_numbers = #tpu.dot_dimension_numbers<[1], [0], [0], [1], [0, 0, 1, 1], [], []>} : vector<8x32xbf16>, vector<32x128xbf16>, vector<8x128xf32> -> vector<8x128xf32>
    %116 = arith.addf %115, %23 : vector<8x128xf32>
    %117 = arith.negf %116 : vector<8x128xf32>
    %118 = math.exp %117 : vector<8x128xf32>
    %cst_47 = arith.constant 1.000000e+00 : f32
    %119 = vector.broadcast %cst_47 : f32 to vector<8x128xf32>
    %120 = arith.addf %119, %118 : vector<8x128xf32>
    %121 = arith.divf %119, %120 : vector<8x128xf32>
    %122 = vector.extract_strided_slice %121 {offsets = [0, 0], sizes = [8, 32], strides = [1, 1]} : vector<8x128xf32> to vector<8x32xf32>
    %123 = vector.extract_strided_slice %121 {offsets = [0, 32], sizes = [8, 32], strides = [1, 1]} : vector<8x128xf32> to vector<8x32xf32>
    %124 = vector.extract_strided_slice %121 {offsets = [0, 64], sizes = [8, 32], strides = [1, 1]} : vector<8x128xf32> to vector<8x32xf32>
    %cst_48 = arith.constant 2.000000e+00 : f32
    %125 = vector.broadcast %cst_48 : f32 to vector<8x32xf32>
    %126 = arith.mulf %125, %124 : vector<8x32xf32>
    %cst_49 = arith.constant 1.000000e+00 : f32
    %127 = vector.broadcast %cst_49 : f32 to vector<8x32xf32>
    %128 = arith.subf %126, %127 : vector<8x32xf32>
    %129 = vector.extract_strided_slice %121 {offsets = [0, 96], sizes = [8, 32], strides = [1, 1]} : vector<8x128xf32> to vector<8x32xf32>
    %130 = arith.mulf %123, %89 : vector<8x32xf32>
    %131 = arith.mulf %122, %128 : vector<8x32xf32>
    %132 = arith.addf %130, %131 : vector<8x32xf32>
    %133 = math.tanh %132 : vector<8x32xf32>
    %134 = arith.mulf %129, %133 : vector<8x32xf32>
    %135 = tpu.concatenate %91, %113 in 1 : vector<8x32xf32>, vector<8x32xf32> -> vector<8x64xf32>
    %136 = arith.truncf %135 : vector<8x64xf32> to vector<8x64xbf16>
    %cst_50 = arith.constant dense<0.000000e+00> : vector<8x128xf32>
    %137 = tpu.matmul %136, %2, %cst_50 {dimension_numbers = #tpu.dot_dimension_numbers<[1], [0], [0], [1], [0, 0, 1, 1], [], []>} : vector<8x64xbf16>, vector<64x128xbf16>, vector<8x128xf32> -> vector<8x128xf32>
    %138 = arith.addf %137, %8 : vector<8x128xf32>
    %139 = arith.negf %138 : vector<8x128xf32>
    %140 = math.exp %139 : vector<8x128xf32>
    %cst_51 = arith.constant 1.000000e+00 : f32
    %141 = vector.broadcast %cst_51 : f32 to vector<8x128xf32>
    %142 = arith.addf %141, %140 : vector<8x128xf32>
    %143 = arith.divf %141, %142 : vector<8x128xf32>
    %144 = vector.extract_strided_slice %143 {offsets = [0, 0], sizes = [8, 32], strides = [1, 1]} : vector<8x128xf32> to vector<8x32xf32>
    %145 = vector.extract_strided_slice %143 {offsets = [0, 32], sizes = [8, 32], strides = [1, 1]} : vector<8x128xf32> to vector<8x32xf32>
    %146 = vector.extract_strided_slice %143 {offsets = [0, 64], sizes = [8, 32], strides = [1, 1]} : vector<8x128xf32> to vector<8x32xf32>
    %cst_52 = arith.constant 2.000000e+00 : f32
    %147 = vector.broadcast %cst_52 : f32 to vector<8x32xf32>
    %148 = arith.mulf %147, %146 : vector<8x32xf32>
    %cst_53 = arith.constant 1.000000e+00 : f32
    %149 = vector.broadcast %cst_53 : f32 to vector<8x32xf32>
    %150 = arith.subf %148, %149 : vector<8x32xf32>
    %151 = vector.extract_strided_slice %143 {offsets = [0, 96], sizes = [8, 32], strides = [1, 1]} : vector<8x128xf32> to vector<8x32xf32>
    %152 = arith.mulf %145, %111 : vector<8x32xf32>
    %153 = arith.mulf %144, %150 : vector<8x32xf32>
    %154 = arith.addf %152, %153 : vector<8x32xf32>
    %155 = math.tanh %154 : vector<8x32xf32>
    %156 = arith.mulf %151, %155 : vector<8x32xf32>
    %157 = arith.truncf %134 : vector<8x32xf32> to vector<8x32xbf16>
    %cst_54 = arith.constant dense<0.000000e+00> : vector<8x128xf32>
    %158 = tpu.matmul %157, %0, %cst_54 {dimension_numbers = #tpu.dot_dimension_numbers<[1], [0], [0], [1], [0, 0, 1, 1], [], []>} : vector<8x32xbf16>, vector<32x128xbf16>, vector<8x128xf32> -> vector<8x128xf32>
    %159 = arith.addf %158, %28 : vector<8x128xf32>
    %160 = arith.negf %159 : vector<8x128xf32>
    %161 = math.exp %160 : vector<8x128xf32>
    %cst_55 = arith.constant 1.000000e+00 : f32
    %162 = vector.broadcast %cst_55 : f32 to vector<8x128xf32>
    %163 = arith.addf %162, %161 : vector<8x128xf32>
    %164 = arith.divf %162, %163 : vector<8x128xf32>
    %165 = vector.extract_strided_slice %164 {offsets = [0, 0], sizes = [8, 32], strides = [1, 1]} : vector<8x128xf32> to vector<8x32xf32>
    %166 = vector.extract_strided_slice %164 {offsets = [0, 32], sizes = [8, 32], strides = [1, 1]} : vector<8x128xf32> to vector<8x32xf32>
    %167 = vector.extract_strided_slice %164 {offsets = [0, 64], sizes = [8, 32], strides = [1, 1]} : vector<8x128xf32> to vector<8x32xf32>
    %cst_56 = arith.constant 2.000000e+00 : f32
    %168 = vector.broadcast %cst_56 : f32 to vector<8x32xf32>
    %169 = arith.mulf %168, %167 : vector<8x32xf32>
    %cst_57 = arith.constant 1.000000e+00 : f32
    %170 = vector.broadcast %cst_57 : f32 to vector<8x32xf32>
    %171 = arith.subf %169, %170 : vector<8x32xf32>
    %172 = vector.extract_strided_slice %164 {offsets = [0, 96], sizes = [8, 32], strides = [1, 1]} : vector<8x128xf32> to vector<8x32xf32>
    %173 = arith.mulf %166, %132 : vector<8x32xf32>
    %174 = arith.mulf %165, %171 : vector<8x32xf32>
    %175 = arith.addf %173, %174 : vector<8x32xf32>
    %176 = math.tanh %175 : vector<8x32xf32>
    %177 = arith.mulf %172, %176 : vector<8x32xf32>
    %178 = tpu.concatenate %134, %156 in 1 : vector<8x32xf32>, vector<8x32xf32> -> vector<8x64xf32>
    %179 = arith.truncf %178 : vector<8x64xf32> to vector<8x64xbf16>
    %cst_58 = arith.constant dense<0.000000e+00> : vector<8x128xf32>
    %180 = tpu.matmul %179, %2, %cst_58 {dimension_numbers = #tpu.dot_dimension_numbers<[1], [0], [0], [1], [0, 0, 1, 1], [], []>} : vector<8x64xbf16>, vector<64x128xbf16>, vector<8x128xf32> -> vector<8x128xf32>
    %181 = arith.addf %180, %8 : vector<8x128xf32>
    %182 = arith.negf %181 : vector<8x128xf32>
    %183 = math.exp %182 : vector<8x128xf32>
    %cst_59 = arith.constant 1.000000e+00 : f32
    %184 = vector.broadcast %cst_59 : f32 to vector<8x128xf32>
    %185 = arith.addf %184, %183 : vector<8x128xf32>
    %186 = arith.divf %184, %185 : vector<8x128xf32>
    %187 = vector.extract_strided_slice %186 {offsets = [0, 0], sizes = [8, 32], strides = [1, 1]} : vector<8x128xf32> to vector<8x32xf32>
    %188 = vector.extract_strided_slice %186 {offsets = [0, 32], sizes = [8, 32], strides = [1, 1]} : vector<8x128xf32> to vector<8x32xf32>
    %189 = vector.extract_strided_slice %186 {offsets = [0, 64], sizes = [8, 32], strides = [1, 1]} : vector<8x128xf32> to vector<8x32xf32>
    %cst_60 = arith.constant 2.000000e+00 : f32
    %190 = vector.broadcast %cst_60 : f32 to vector<8x32xf32>
    %191 = arith.mulf %190, %189 : vector<8x32xf32>
    %cst_61 = arith.constant 1.000000e+00 : f32
    %192 = vector.broadcast %cst_61 : f32 to vector<8x32xf32>
    %193 = arith.subf %191, %192 : vector<8x32xf32>
    %194 = vector.extract_strided_slice %186 {offsets = [0, 96], sizes = [8, 32], strides = [1, 1]} : vector<8x128xf32> to vector<8x32xf32>
    %195 = arith.mulf %188, %154 : vector<8x32xf32>
    %196 = arith.mulf %187, %193 : vector<8x32xf32>
    %197 = arith.addf %195, %196 : vector<8x32xf32>
    %198 = math.tanh %197 : vector<8x32xf32>
    %199 = arith.mulf %194, %198 : vector<8x32xf32>
    %200 = arith.truncf %177 : vector<8x32xf32> to vector<8x32xbf16>
    %cst_62 = arith.constant dense<0.000000e+00> : vector<8x128xf32>
    %201 = tpu.matmul %200, %0, %cst_62 {dimension_numbers = #tpu.dot_dimension_numbers<[1], [0], [0], [1], [0, 0, 1, 1], [], []>} : vector<8x32xbf16>, vector<32x128xbf16>, vector<8x128xf32> -> vector<8x128xf32>
    %202 = arith.addf %201, %33 : vector<8x128xf32>
    %203 = arith.negf %202 : vector<8x128xf32>
    %204 = math.exp %203 : vector<8x128xf32>
    %cst_63 = arith.constant 1.000000e+00 : f32
    %205 = vector.broadcast %cst_63 : f32 to vector<8x128xf32>
    %206 = arith.addf %205, %204 : vector<8x128xf32>
    %207 = arith.divf %205, %206 : vector<8x128xf32>
    %208 = vector.extract_strided_slice %207 {offsets = [0, 0], sizes = [8, 32], strides = [1, 1]} : vector<8x128xf32> to vector<8x32xf32>
    %209 = vector.extract_strided_slice %207 {offsets = [0, 32], sizes = [8, 32], strides = [1, 1]} : vector<8x128xf32> to vector<8x32xf32>
    %210 = vector.extract_strided_slice %207 {offsets = [0, 64], sizes = [8, 32], strides = [1, 1]} : vector<8x128xf32> to vector<8x32xf32>
    %cst_64 = arith.constant 2.000000e+00 : f32
    %211 = vector.broadcast %cst_64 : f32 to vector<8x32xf32>
    %212 = arith.mulf %211, %210 : vector<8x32xf32>
    %cst_65 = arith.constant 1.000000e+00 : f32
    %213 = vector.broadcast %cst_65 : f32 to vector<8x32xf32>
    %214 = arith.subf %212, %213 : vector<8x32xf32>
    %215 = vector.extract_strided_slice %207 {offsets = [0, 96], sizes = [8, 32], strides = [1, 1]} : vector<8x128xf32> to vector<8x32xf32>
    %216 = arith.mulf %209, %175 : vector<8x32xf32>
    %217 = arith.mulf %208, %214 : vector<8x32xf32>
    %218 = arith.addf %216, %217 : vector<8x32xf32>
    %219 = math.tanh %218 : vector<8x32xf32>
    %220 = arith.mulf %215, %219 : vector<8x32xf32>
    %221 = tpu.concatenate %177, %199 in 1 : vector<8x32xf32>, vector<8x32xf32> -> vector<8x64xf32>
    %222 = arith.truncf %221 : vector<8x64xf32> to vector<8x64xbf16>
    %cst_66 = arith.constant dense<0.000000e+00> : vector<8x128xf32>
    %223 = tpu.matmul %222, %2, %cst_66 {dimension_numbers = #tpu.dot_dimension_numbers<[1], [0], [0], [1], [0, 0, 1, 1], [], []>} : vector<8x64xbf16>, vector<64x128xbf16>, vector<8x128xf32> -> vector<8x128xf32>
    %224 = arith.addf %223, %8 : vector<8x128xf32>
    %225 = arith.negf %224 : vector<8x128xf32>
    %226 = math.exp %225 : vector<8x128xf32>
    %cst_67 = arith.constant 1.000000e+00 : f32
    %227 = vector.broadcast %cst_67 : f32 to vector<8x128xf32>
    %228 = arith.addf %227, %226 : vector<8x128xf32>
    %229 = arith.divf %227, %228 : vector<8x128xf32>
    %230 = vector.extract_strided_slice %229 {offsets = [0, 0], sizes = [8, 32], strides = [1, 1]} : vector<8x128xf32> to vector<8x32xf32>
    %231 = vector.extract_strided_slice %229 {offsets = [0, 32], sizes = [8, 32], strides = [1, 1]} : vector<8x128xf32> to vector<8x32xf32>
    %232 = vector.extract_strided_slice %229 {offsets = [0, 64], sizes = [8, 32], strides = [1, 1]} : vector<8x128xf32> to vector<8x32xf32>
    %cst_68 = arith.constant 2.000000e+00 : f32
    %233 = vector.broadcast %cst_68 : f32 to vector<8x32xf32>
    %234 = arith.mulf %233, %232 : vector<8x32xf32>
    %cst_69 = arith.constant 1.000000e+00 : f32
    %235 = vector.broadcast %cst_69 : f32 to vector<8x32xf32>
    %236 = arith.subf %234, %235 : vector<8x32xf32>
    %237 = vector.extract_strided_slice %229 {offsets = [0, 96], sizes = [8, 32], strides = [1, 1]} : vector<8x128xf32> to vector<8x32xf32>
    %238 = arith.mulf %231, %197 : vector<8x32xf32>
    %239 = arith.mulf %230, %236 : vector<8x32xf32>
    %240 = arith.addf %238, %239 : vector<8x32xf32>
    %241 = math.tanh %240 : vector<8x32xf32>
    %242 = arith.mulf %237, %241 : vector<8x32xf32>
    %243 = arith.truncf %220 : vector<8x32xf32> to vector<8x32xbf16>
    %cst_70 = arith.constant dense<0.000000e+00> : vector<8x128xf32>
    %244 = tpu.matmul %243, %0, %cst_70 {dimension_numbers = #tpu.dot_dimension_numbers<[1], [0], [0], [1], [0, 0, 1, 1], [], []>} : vector<8x32xbf16>, vector<32x128xbf16>, vector<8x128xf32> -> vector<8x128xf32>
    %245 = arith.addf %244, %38 : vector<8x128xf32>
    %246 = arith.negf %245 : vector<8x128xf32>
    %247 = math.exp %246 : vector<8x128xf32>
    %cst_71 = arith.constant 1.000000e+00 : f32
    %248 = vector.broadcast %cst_71 : f32 to vector<8x128xf32>
    %249 = arith.addf %248, %247 : vector<8x128xf32>
    %250 = arith.divf %248, %249 : vector<8x128xf32>
    %251 = vector.extract_strided_slice %250 {offsets = [0, 0], sizes = [8, 32], strides = [1, 1]} : vector<8x128xf32> to vector<8x32xf32>
    %252 = vector.extract_strided_slice %250 {offsets = [0, 32], sizes = [8, 32], strides = [1, 1]} : vector<8x128xf32> to vector<8x32xf32>
    %253 = vector.extract_strided_slice %250 {offsets = [0, 64], sizes = [8, 32], strides = [1, 1]} : vector<8x128xf32> to vector<8x32xf32>
    %cst_72 = arith.constant 2.000000e+00 : f32
    %254 = vector.broadcast %cst_72 : f32 to vector<8x32xf32>
    %255 = arith.mulf %254, %253 : vector<8x32xf32>
    %cst_73 = arith.constant 1.000000e+00 : f32
    %256 = vector.broadcast %cst_73 : f32 to vector<8x32xf32>
    %257 = arith.subf %255, %256 : vector<8x32xf32>
    %258 = vector.extract_strided_slice %250 {offsets = [0, 96], sizes = [8, 32], strides = [1, 1]} : vector<8x128xf32> to vector<8x32xf32>
    %259 = arith.mulf %252, %218 : vector<8x32xf32>
    %260 = arith.mulf %251, %257 : vector<8x32xf32>
    %261 = arith.addf %259, %260 : vector<8x32xf32>
    %262 = math.tanh %261 : vector<8x32xf32>
    %263 = arith.mulf %258, %262 : vector<8x32xf32>
    %264 = tpu.concatenate %220, %242 in 1 : vector<8x32xf32>, vector<8x32xf32> -> vector<8x64xf32>
    %265 = arith.truncf %264 : vector<8x64xf32> to vector<8x64xbf16>
    %cst_74 = arith.constant dense<0.000000e+00> : vector<8x128xf32>
    %266 = tpu.matmul %265, %2, %cst_74 {dimension_numbers = #tpu.dot_dimension_numbers<[1], [0], [0], [1], [0, 0, 1, 1], [], []>} : vector<8x64xbf16>, vector<64x128xbf16>, vector<8x128xf32> -> vector<8x128xf32>
    %267 = arith.addf %266, %8 : vector<8x128xf32>
    %268 = arith.negf %267 : vector<8x128xf32>
    %269 = math.exp %268 : vector<8x128xf32>
    %cst_75 = arith.constant 1.000000e+00 : f32
    %270 = vector.broadcast %cst_75 : f32 to vector<8x128xf32>
    %271 = arith.addf %270, %269 : vector<8x128xf32>
    %272 = arith.divf %270, %271 : vector<8x128xf32>
    %273 = vector.extract_strided_slice %272 {offsets = [0, 0], sizes = [8, 32], strides = [1, 1]} : vector<8x128xf32> to vector<8x32xf32>
    %274 = vector.extract_strided_slice %272 {offsets = [0, 32], sizes = [8, 32], strides = [1, 1]} : vector<8x128xf32> to vector<8x32xf32>
    %275 = vector.extract_strided_slice %272 {offsets = [0, 64], sizes = [8, 32], strides = [1, 1]} : vector<8x128xf32> to vector<8x32xf32>
    %cst_76 = arith.constant 2.000000e+00 : f32
    %276 = vector.broadcast %cst_76 : f32 to vector<8x32xf32>
    %277 = arith.mulf %276, %275 : vector<8x32xf32>
    %cst_77 = arith.constant 1.000000e+00 : f32
    %278 = vector.broadcast %cst_77 : f32 to vector<8x32xf32>
    %279 = arith.subf %277, %278 : vector<8x32xf32>
    %280 = vector.extract_strided_slice %272 {offsets = [0, 96], sizes = [8, 32], strides = [1, 1]} : vector<8x128xf32> to vector<8x32xf32>
    %281 = arith.mulf %274, %240 : vector<8x32xf32>
    %282 = arith.mulf %273, %279 : vector<8x32xf32>
    %283 = arith.addf %281, %282 : vector<8x32xf32>
    %284 = math.tanh %283 : vector<8x32xf32>
    %285 = arith.mulf %280, %284 : vector<8x32xf32>
    %286 = arith.truncf %263 : vector<8x32xf32> to vector<8x32xbf16>
    %cst_78 = arith.constant dense<0.000000e+00> : vector<8x128xf32>
    %287 = tpu.matmul %286, %0, %cst_78 {dimension_numbers = #tpu.dot_dimension_numbers<[1], [0], [0], [1], [0, 0, 1, 1], [], []>} : vector<8x32xbf16>, vector<32x128xbf16>, vector<8x128xf32> -> vector<8x128xf32>
    %288 = arith.addf %287, %43 : vector<8x128xf32>
    %289 = arith.negf %288 : vector<8x128xf32>
    %290 = math.exp %289 : vector<8x128xf32>
    %cst_79 = arith.constant 1.000000e+00 : f32
    %291 = vector.broadcast %cst_79 : f32 to vector<8x128xf32>
    %292 = arith.addf %291, %290 : vector<8x128xf32>
    %293 = arith.divf %291, %292 : vector<8x128xf32>
    %294 = vector.extract_strided_slice %293 {offsets = [0, 0], sizes = [8, 32], strides = [1, 1]} : vector<8x128xf32> to vector<8x32xf32>
    %295 = vector.extract_strided_slice %293 {offsets = [0, 32], sizes = [8, 32], strides = [1, 1]} : vector<8x128xf32> to vector<8x32xf32>
    %296 = vector.extract_strided_slice %293 {offsets = [0, 64], sizes = [8, 32], strides = [1, 1]} : vector<8x128xf32> to vector<8x32xf32>
    %cst_80 = arith.constant 2.000000e+00 : f32
    %297 = vector.broadcast %cst_80 : f32 to vector<8x32xf32>
    %298 = arith.mulf %297, %296 : vector<8x32xf32>
    %cst_81 = arith.constant 1.000000e+00 : f32
    %299 = vector.broadcast %cst_81 : f32 to vector<8x32xf32>
    %300 = arith.subf %298, %299 : vector<8x32xf32>
    %301 = vector.extract_strided_slice %293 {offsets = [0, 96], sizes = [8, 32], strides = [1, 1]} : vector<8x128xf32> to vector<8x32xf32>
    %302 = arith.mulf %295, %261 : vector<8x32xf32>
    %303 = arith.mulf %294, %300 : vector<8x32xf32>
    %304 = arith.addf %302, %303 : vector<8x32xf32>
    %305 = math.tanh %304 : vector<8x32xf32>
    %306 = arith.mulf %301, %305 : vector<8x32xf32>
    %307 = tpu.concatenate %263, %285 in 1 : vector<8x32xf32>, vector<8x32xf32> -> vector<8x64xf32>
    %308 = arith.truncf %307 : vector<8x64xf32> to vector<8x64xbf16>
    %cst_82 = arith.constant dense<0.000000e+00> : vector<8x128xf32>
    %309 = tpu.matmul %308, %2, %cst_82 {dimension_numbers = #tpu.dot_dimension_numbers<[1], [0], [0], [1], [0, 0, 1, 1], [], []>} : vector<8x64xbf16>, vector<64x128xbf16>, vector<8x128xf32> -> vector<8x128xf32>
    %310 = arith.addf %309, %8 : vector<8x128xf32>
    %311 = arith.negf %310 : vector<8x128xf32>
    %312 = math.exp %311 : vector<8x128xf32>
    %cst_83 = arith.constant 1.000000e+00 : f32
    %313 = vector.broadcast %cst_83 : f32 to vector<8x128xf32>
    %314 = arith.addf %313, %312 : vector<8x128xf32>
    %315 = arith.divf %313, %314 : vector<8x128xf32>
    %316 = vector.extract_strided_slice %315 {offsets = [0, 0], sizes = [8, 32], strides = [1, 1]} : vector<8x128xf32> to vector<8x32xf32>
    %317 = vector.extract_strided_slice %315 {offsets = [0, 32], sizes = [8, 32], strides = [1, 1]} : vector<8x128xf32> to vector<8x32xf32>
    %318 = vector.extract_strided_slice %315 {offsets = [0, 64], sizes = [8, 32], strides = [1, 1]} : vector<8x128xf32> to vector<8x32xf32>
    %cst_84 = arith.constant 2.000000e+00 : f32
    %319 = vector.broadcast %cst_84 : f32 to vector<8x32xf32>
    %320 = arith.mulf %319, %318 : vector<8x32xf32>
    %cst_85 = arith.constant 1.000000e+00 : f32
    %321 = vector.broadcast %cst_85 : f32 to vector<8x32xf32>
    %322 = arith.subf %320, %321 : vector<8x32xf32>
    %323 = vector.extract_strided_slice %315 {offsets = [0, 96], sizes = [8, 32], strides = [1, 1]} : vector<8x128xf32> to vector<8x32xf32>
    %324 = arith.mulf %317, %283 : vector<8x32xf32>
    %325 = arith.mulf %316, %322 : vector<8x32xf32>
    %326 = arith.addf %324, %325 : vector<8x32xf32>
    %327 = math.tanh %326 : vector<8x32xf32>
    %328 = arith.mulf %323, %327 : vector<8x32xf32>
    %329 = arith.truncf %306 : vector<8x32xf32> to vector<8x32xbf16>
    %cst_86 = arith.constant dense<0.000000e+00> : vector<8x128xf32>
    %330 = tpu.matmul %329, %0, %cst_86 {dimension_numbers = #tpu.dot_dimension_numbers<[1], [0], [0], [1], [0, 0, 1, 1], [], []>} : vector<8x32xbf16>, vector<32x128xbf16>, vector<8x128xf32> -> vector<8x128xf32>
    %331 = arith.addf %330, %48 : vector<8x128xf32>
    %332 = arith.negf %331 : vector<8x128xf32>
    %333 = math.exp %332 : vector<8x128xf32>
    %cst_87 = arith.constant 1.000000e+00 : f32
    %334 = vector.broadcast %cst_87 : f32 to vector<8x128xf32>
    %335 = arith.addf %334, %333 : vector<8x128xf32>
    %336 = arith.divf %334, %335 : vector<8x128xf32>
    %337 = vector.extract_strided_slice %336 {offsets = [0, 0], sizes = [8, 32], strides = [1, 1]} : vector<8x128xf32> to vector<8x32xf32>
    %338 = vector.extract_strided_slice %336 {offsets = [0, 32], sizes = [8, 32], strides = [1, 1]} : vector<8x128xf32> to vector<8x32xf32>
    %339 = vector.extract_strided_slice %336 {offsets = [0, 64], sizes = [8, 32], strides = [1, 1]} : vector<8x128xf32> to vector<8x32xf32>
    %cst_88 = arith.constant 2.000000e+00 : f32
    %340 = vector.broadcast %cst_88 : f32 to vector<8x32xf32>
    %341 = arith.mulf %340, %339 : vector<8x32xf32>
    %cst_89 = arith.constant 1.000000e+00 : f32
    %342 = vector.broadcast %cst_89 : f32 to vector<8x32xf32>
    %343 = arith.subf %341, %342 : vector<8x32xf32>
    %344 = vector.extract_strided_slice %336 {offsets = [0, 96], sizes = [8, 32], strides = [1, 1]} : vector<8x128xf32> to vector<8x32xf32>
    %345 = arith.mulf %338, %304 : vector<8x32xf32>
    %346 = arith.mulf %337, %343 : vector<8x32xf32>
    %347 = arith.addf %345, %346 : vector<8x32xf32>
    %348 = math.tanh %347 : vector<8x32xf32>
    %349 = arith.mulf %344, %348 : vector<8x32xf32>
    %350 = tpu.concatenate %306, %328 in 1 : vector<8x32xf32>, vector<8x32xf32> -> vector<8x64xf32>
    %351 = arith.truncf %350 : vector<8x64xf32> to vector<8x64xbf16>
    %cst_90 = arith.constant dense<0.000000e+00> : vector<8x128xf32>
    %352 = tpu.matmul %351, %2, %cst_90 {dimension_numbers = #tpu.dot_dimension_numbers<[1], [0], [0], [1], [0, 0, 1, 1], [], []>} : vector<8x64xbf16>, vector<64x128xbf16>, vector<8x128xf32> -> vector<8x128xf32>
    %353 = arith.addf %352, %8 : vector<8x128xf32>
    %354 = arith.negf %353 : vector<8x128xf32>
    %355 = math.exp %354 : vector<8x128xf32>
    %cst_91 = arith.constant 1.000000e+00 : f32
    %356 = vector.broadcast %cst_91 : f32 to vector<8x128xf32>
    %357 = arith.addf %356, %355 : vector<8x128xf32>
    %358 = arith.divf %356, %357 : vector<8x128xf32>
    %359 = vector.extract_strided_slice %358 {offsets = [0, 0], sizes = [8, 32], strides = [1, 1]} : vector<8x128xf32> to vector<8x32xf32>
    %360 = vector.extract_strided_slice %358 {offsets = [0, 32], sizes = [8, 32], strides = [1, 1]} : vector<8x128xf32> to vector<8x32xf32>
    %361 = vector.extract_strided_slice %358 {offsets = [0, 64], sizes = [8, 32], strides = [1, 1]} : vector<8x128xf32> to vector<8x32xf32>
    %cst_92 = arith.constant 2.000000e+00 : f32
    %362 = vector.broadcast %cst_92 : f32 to vector<8x32xf32>
    %363 = arith.mulf %362, %361 : vector<8x32xf32>
    %cst_93 = arith.constant 1.000000e+00 : f32
    %364 = vector.broadcast %cst_93 : f32 to vector<8x32xf32>
    %365 = arith.subf %363, %364 : vector<8x32xf32>
    %366 = vector.extract_strided_slice %358 {offsets = [0, 96], sizes = [8, 32], strides = [1, 1]} : vector<8x128xf32> to vector<8x32xf32>
    %367 = arith.mulf %360, %326 : vector<8x32xf32>
    %368 = arith.mulf %359, %365 : vector<8x32xf32>
    %369 = arith.addf %367, %368 : vector<8x32xf32>
    %370 = math.tanh %369 : vector<8x32xf32>
    %371 = arith.mulf %366, %370 : vector<8x32xf32>
    %372 = tpu.concatenate %349, %371 in 1 : vector<8x32xf32>, vector<8x32xf32> -> vector<8x64xf32>
    %373 = arith.truncf %372 : vector<8x64xf32> to vector<8x64xbf16>
    %cst_94 = arith.constant dense<0.000000e+00> : vector<8x128xf32>
    %374 = tpu.matmul %373, %2, %cst_94 {dimension_numbers = #tpu.dot_dimension_numbers<[1], [0], [0], [1], [0, 0, 1, 1], [], []>} : vector<8x64xbf16>, vector<64x128xbf16>, vector<8x128xf32> -> vector<8x128xf32>
    %375 = arith.addf %374, %8 : vector<8x128xf32>
    %376 = arith.negf %375 : vector<8x128xf32>
    %377 = math.exp %376 : vector<8x128xf32>
    %cst_95 = arith.constant 1.000000e+00 : f32
    %378 = vector.broadcast %cst_95 : f32 to vector<8x128xf32>
    %379 = arith.addf %378, %377 : vector<8x128xf32>
    %380 = arith.divf %378, %379 : vector<8x128xf32>
    %381 = vector.extract_strided_slice %380 {offsets = [0, 0], sizes = [8, 32], strides = [1, 1]} : vector<8x128xf32> to vector<8x32xf32>
    %382 = vector.extract_strided_slice %380 {offsets = [0, 32], sizes = [8, 32], strides = [1, 1]} : vector<8x128xf32> to vector<8x32xf32>
    %383 = vector.extract_strided_slice %380 {offsets = [0, 64], sizes = [8, 32], strides = [1, 1]} : vector<8x128xf32> to vector<8x32xf32>
    %cst_96 = arith.constant 2.000000e+00 : f32
    %384 = vector.broadcast %cst_96 : f32 to vector<8x32xf32>
    %385 = arith.mulf %384, %383 : vector<8x32xf32>
    %cst_97 = arith.constant 1.000000e+00 : f32
    %386 = vector.broadcast %cst_97 : f32 to vector<8x32xf32>
    %387 = arith.subf %385, %386 : vector<8x32xf32>
    %388 = vector.extract_strided_slice %380 {offsets = [0, 96], sizes = [8, 32], strides = [1, 1]} : vector<8x128xf32> to vector<8x32xf32>
    %389 = arith.mulf %382, %369 : vector<8x32xf32>
    %390 = arith.mulf %381, %387 : vector<8x32xf32>
    %391 = arith.addf %389, %390 : vector<8x32xf32>
    %392 = math.tanh %391 : vector<8x32xf32>
    %393 = arith.mulf %388, %392 : vector<8x32xf32>
    %c0_98 = arith.constant 0 : index
    %c0_99 = arith.constant 0 : index
    %394 = vector.load %arg7[%c0_98, %c0_99] : memref<32x1xf32, #tpu.memory_space<vmem>>, vector<32x1xf32>
    %cst_100 = arith.constant dense<0.000000e+00> : vector<8x1xf32>
    %395 = tpu.matmul %393, %394, %cst_100 {dimension_numbers = #tpu.dot_dimension_numbers<[1], [0], [0], [1], [0, 0, 1, 1], [], []>} : vector<8x32xf32>, vector<32x1xf32>, vector<8x1xf32> -> vector<8x1xf32>
    %c0_101 = arith.constant 0 : index
    %c0_102 = arith.constant 0 : index
    %396 = vector.load %arg8[%c0_101, %c0_102] : memref<1x1xf32, #tpu.memory_space<vmem>>, vector<1x1xf32>
    %397 = vector.broadcast %396 : vector<1x1xf32> to vector<8x1xf32>
    %398 = arith.addf %395, %397 : vector<8x1xf32>
    %c0_103 = arith.constant 0 : index
    %c0_104 = arith.constant 0 : index
    %399 = vector.load %arg9[%c0_103, %c0_104] : memref<8x1xf32, #tpu.memory_space<vmem>>, vector<8x1xf32>
    tpu.vector_store %arg9[%c0_103, %c0_104], %398 {strides = array<i32>} : memref<8x1xf32, #tpu.memory_space<vmem>>, vector<8x1xf32>,
    return
  }
  func.func @transform_0(%arg0: i32) -> (i32, i32, i32) {
    %c0_i32 = arith.constant 0 : i32
    %c0_i32_0 = arith.constant 0 : i32
    %c0_i32_1 = arith.constant 0 : i32
    return %c0_i32, %arg0, %c0_i32_0 : i32, i32, i32
  }
  func.func @transform_1(%arg0: i32) -> (i32, i32) {
    %c0_i32 = arith.constant 0 : i32
    %c0_i32_0 = arith.constant 0 : i32
    %c0_i32_1 = arith.constant 0 : i32
    return %c0_i32, %c0_i32_0 : i32, i32
  }
  func.func @transform_2(%arg0: i32) -> (i32, i32) {
    %c0_i32 = arith.constant 0 : i32
    %c0_i32_0 = arith.constant 0 : i32
    %c0_i32_1 = arith.constant 0 : i32
    return %c0_i32, %c0_i32_0 : i32, i32
  }
  func.func @transform_3(%arg0: i32) -> (i32, i32) {
    %c0_i32 = arith.constant 0 : i32
    %c0_i32_0 = arith.constant 0 : i32
    %c0_i32_1 = arith.constant 0 : i32
    return %c0_i32, %c0_i32_0 : i32, i32
  }
  func.func @transform_4(%arg0: i32) -> (i32, i32) {
    %c0_i32 = arith.constant 0 : i32
    %c0_i32_0 = arith.constant 0 : i32
    %c0_i32_1 = arith.constant 0 : i32
    return %c0_i32, %c0_i32_0 : i32, i32
  }
  func.func @transform_5(%arg0: i32) -> (i32, i32) {
    %c0_i32 = arith.constant 0 : i32
    %c0_i32_0 = arith.constant 0 : i32
    %c0_i32_1 = arith.constant 0 : i32
    return %c0_i32, %c0_i32_0 : i32, i32
  }
  func.func @transform_6(%arg0: i32) -> (i32, i32) {
    %c0_i32 = arith.constant 0 : i32
    %c0_i32_0 = arith.constant 0 : i32
    %c0_i32_1 = arith.constant 0 : i32
    return %c0_i32, %c0_i32_0 : i32, i32
  }
  func.func @transform_7(%arg0: i32) -> (i32, i32) {
    %c0_i32 = arith.constant 0 : i32
    %c0_i32_0 = arith.constant 0 : i32
    %c0_i32_1 = arith.constant 0 : i32
    return %c0_i32, %c0_i32_0 : i32, i32
  }
  func.func @transform_8(%arg0: i32) -> (i32, i32) {
    %c0_i32 = arith.constant 0 : i32
    %c0_i32_0 = arith.constant 0 : i32
    return %arg0, %c0_i32 : i32, i32
  }
}

</mosaic_0001>

<llo_original>
// kernel: tpu_custom_call.1
$region0: #{tpu_custom_call.1}
  #allocation0 [shape = 'u32[]', space=smem, size = 0x4, offset = 0x4, fixed_abs, tag = 'smem constant byte address 0x4 - core index']
  #allocation1 [shape = 'u32[144,128]{1,0:T(1,128)}', space=vmem, size = 0x12000, scoped, tag = 'internal scratch']
  #allocation2 [shape = 'f32[1,1]{1,0:T(1,128)S(1)}', space=vmem, size = 0x200, scoped, tag = 'scoped memory for tpu_custom_call.1']
  %s0 = inlined_call_operand.vmem [shape: f32[8,8,4], index: 0, kind: input, shape index: {}]
  %s1 = inlined_call_operand.vmem [shape: bf16[4,128], index: 1, kind: input, shape index: {}]
  %s2 = inlined_call_operand.vmem [shape: bf16[32,128], index: 2, kind: input, shape index: {}]
  %s3 = inlined_call_operand.vmem [shape: f32[1,128], index: 3, kind: input, shape index: {}]
  %s4 = inlined_call_operand.vmem [shape: bf16[64,128], index: 4, kind: input, shape index: {}]
  %s5 = inlined_call_operand.vmem [shape: f32[1,128], index: 5, kind: input, shape index: {}]
  %s6 = inlined_call_operand.vmem [shape: f32[32,1], index: 6, kind: input, shape index: {}]
  %s7 = inlined_call_operand.<no memory space> [shape: f32[1,1], index: 7, kind: input, shape index: {}]
  %s8 = inlined_call_operand.vmem [shape: f32[8,1], index: 8, kind: output, shape index: {}]
  %s9 = sld [smem:[#allocation0]]
  $region42: #{tpu_custom_call.1} parent=0
    _
  %s11 = ssub.s32 1, %s9
  %s12 = scalar_select 0, %s11, %s9
  %v13 = vstv %s7
  %14 = vst [vmem:[#allocation2] sm:$0x1] %v13
  // Predicated region
  $region2: #{tpu_custom_call.1} parent=0 // pred_check
    _
  $region3: #{tpu_custom_call.1} parent=0 // pred_check_branch
    %16 = sbr.rel (0) target = $region5
  $region4: #{tpu_custom_call.1} parent=0 // pred_region
    _
  $region5: #{tpu_custom_call.1} parent=0 // pred_fallthru
    _
  // Predicated region
  $region6: #{tpu_custom_call.1} parent=0 // pred_check
    _
  $region7: #{tpu_custom_call.1} parent=0 // pred_check_branch
    %18 = sbr.rel (0) target = $region9
  $region8: #{tpu_custom_call.1} parent=0 // pred_region
    _
  $region9: #{tpu_custom_call.1} parent=0 // pred_fallthru
    _
  // Predicated region
  $region10: #{tpu_custom_call.1} parent=0 // pred_check
    _
  $region11: #{tpu_custom_call.1} parent=0 // pred_check_branch
    %20 = sbr.rel (0) target = $region13
  $region12: #{tpu_custom_call.1} parent=0 // pred_region
    _
  $region13: #{tpu_custom_call.1} parent=0 // pred_fallthru
    _
  // Predicated region
  $region14: #{tpu_custom_call.1} parent=0 // pred_check
    _
  $region15: #{tpu_custom_call.1} parent=0 // pred_check_branch
    %22 = sbr.rel (0) target = $region17
  $region16: #{tpu_custom_call.1} parent=0 // pred_region
    _
  $region17: #{tpu_custom_call.1} parent=0 // pred_fallthru
    _
  // Predicated region
  $region18: #{tpu_custom_call.1} parent=0 // pred_check
    _
  $region19: #{tpu_custom_call.1} parent=0 // pred_check_branch
    %24 = sbr.rel (0) target = $region21
  $region20: #{tpu_custom_call.1} parent=0 // pred_region
    _
  $region21: #{tpu_custom_call.1} parent=0 // pred_fallthru
    _
  // Predicated region
  $region22: #{tpu_custom_call.1} parent=0 // pred_check
    _
  $region23: #{tpu_custom_call.1} parent=0 // pred_check_branch
    %26 = sbr.rel (0) target = $region25
  $region24: #{tpu_custom_call.1} parent=0 // pred_region
    _
  $region25: #{tpu_custom_call.1} parent=0 // pred_fallthru
    _
  // Predicated region
  $region26: #{tpu_custom_call.1} parent=0 // pred_check
    _
  $region27: #{tpu_custom_call.1} parent=0 // pred_check_branch
    %28 = sbr.rel (0) target = $region29
  $region28: #{tpu_custom_call.1} parent=0 // pred_region
    _
  $region29: #{tpu_custom_call.1} parent=0 // pred_fallthru
    _
  // Predicated region
  $region30: #{tpu_custom_call.1} parent=0 // pred_check
    _
  $region31: #{tpu_custom_call.1} parent=0 // pred_check_branch
    %30 = sbr.rel (0) target = $region33
  $region32: #{tpu_custom_call.1} parent=0 // pred_region
    _
  $region33: #{tpu_custom_call.1} parent=0 // pred_fallthru
    _
  %v32 = vld [vmem:[%s2] sm:$0xf]
  %v33 = vld [vmem:[%s2 + $0x4] sm:$0xf]
  %v34 = vld [vmem:[%s2 + $0x8] sm:$0xf]
  %v35 = vld [vmem:[%s2 + $0xc] sm:$0xf]
  %v36 = vld [vmem:[%s1] sm:$0x3]
  %v37 = vld [vmem:[%s4] sm:$0xf]
  %v38 = vld [vmem:[%s4 + $0x4] sm:$0xf]
  %v39 = vld [vmem:[%s4 + $0x8] sm:$0xf]
  %v40 = vld [vmem:[%s4 + $0xc] sm:$0xf]
  %v41 = vld [vmem:[%s4 + $0x10] sm:$0xf]
  %v42 = vld [vmem:[%s4 + $0x14] sm:$0xf]
  %v43 = vld [vmem:[%s4 + $0x18] sm:$0xf]
  %v44 = vld [vmem:[%s4 + $0x1c] sm:$0xf]
  %v45 = vld [vmem:[%s3] sm:$0x1]
  %v47 = vlaneseq
  %v48 = vshrl.u32 %v47, 7
  %v49 = vsub.s32 0, %v48
  %v50 = vrot.slane %v45, %v49
  %v52 = vld [vmem:[%s5] sm:$0x1]
  %v54 = vlaneseq
  %v55 = vshrl.u32 %v54, 7
  %v56 = vsub.s32 0, %v55
  %v57 = vrot.slane %v52, %v56
  %v59 = vld [vmem:[%s0] sm:$0xff]
  %v60 = vpack.c.bf16 %v59, %v59
  %vm61 = vcmask 31744
  %v63 = vsel %vm61, %v60, 0
  %vm65 = vcmask 1041408
  %v67 = vsel %vm65, %v36, 0
  %69 = vmatprep.subr.bf16.mxu0 0
  %70 = vmatpush1.bf16.msra.mxu0 0
  %71 = vmatprep.subr.bf16.mxu0 0
  %72 = vmatpush1.bf16.msra.mxu0 0
  %73 = vmatprep.subr.bf16.mxu0 0
  %74 = vmatpush1.bf16.msra.mxu0 0
  %75 = vmatprep.subr.bf16.mxu0 0
  %76 = vmatpush1.bf16.msra.mxu0 0
  %77 = vmatprep.subr.bf16.mxu0 0
  %78 = vmatpush1.bf16.msra.mxu0 0
  %79 = vmatprep.subr.bf16.mxu0 0
  %80 = vmatpush1.bf16.msra.mxu0 0
  %81 = vmatprep.subr.bf16.mxu0 0
  %82 = vmatpush1.bf16.msra.mxu0 0
  %83 = vmatprep.subr.bf16.mxu0 0
  %84 = vmatpush1.bf16.msra.mxu0 %v67
  %85 = vmatprep.subr.bf16.mxu0 0
  %86 = vmatpush2.bf16.msra.mxu0 0
  %87 = vmatprep.subr.bf16.mxu0 0
  %88 = vmatpush2.bf16.msra.mxu0 0
  %89 = vmatprep.subr.bf16.mxu0 0
  %90 = vmatpush2.bf16.msra.mxu0 0
  %91 = vmatprep.subr.bf16.mxu0 0
  %92 = vmatpush2.bf16.msra.mxu0 0
  %93 = vmatprep.subr.bf16.mxu0 0
  %94 = vmatpush2.bf16.msra.mxu0 0
  %95 = vmatprep.subr.bf16.mxu0 0
  %96 = vmatpush2.bf16.msra.mxu0 0
  %97 = vmatprep.subr.bf16.mxu0 0
  %98 = vmatpush2.bf16.msra.mxu0 0
  %99 = vmatprep.subr.bf16.mxu0 0
  %100 = vmatpush2.bf16.msra.mxu0 0
  %101 = vmatprep.mubr.bf16.mxu0 0
  %102 = vmatmul.mubr.bf16.gmra.mxu0 %v63
  %v103 = vpop.f32.mrf.mxu0
  %v104 = vadd.f32 %v50, %v103
  %v105 = vpop.f32.mrf.mxu0
  %v106 = vpop.f32.mrf.mxu0
  %v107 = vpop.f32.mrf.mxu0
  %108 = vdwg.mxu0
  %s109 = scalar_lea.vmem %s0, 8
  %v110 = vld [vmem:[%s109] sm:$0xff]
  %v111 = vpack.c.bf16 %v110, %v110
  %v113 = vsel %vm61, %v111, 0
  %115 = vmatprep.subr.bf16.mxu0 0
  %116 = vmatpush1.bf16.msra.mxu0 0
  %117 = vmatprep.subr.bf16.mxu0 0
  %118 = vmatpush1.bf16.msra.mxu0 0
  %119 = vmatprep.subr.bf16.mxu0 0
  %120 = vmatpush1.bf16.msra.mxu0 0
  %121 = vmatprep.subr.bf16.mxu0 0
  %122 = vmatpush1.bf16.msra.mxu0 0
  %123 = vmatprep.subr.bf16.mxu0 0
  %124 = vmatpush1.bf16.msra.mxu0 0
  %125 = vmatprep.subr.bf16.mxu0 0
  %126 = vmatpush1.bf16.msra.mxu0 0
  %127 = vmatprep.subr.bf16.mxu0 0
  %128 = vmatpush1.bf16.msra.mxu0 0
  %129 = vmatprep.subr.bf16.mxu0 0
  %130 = vmatpush1.bf16.msra.mxu0 %v67
  %131 = vmatprep.subr.bf16.mxu0 0
  %132 = vmatpush2.bf16.msra.mxu0 0
  %133 = vmatprep.subr.bf16.mxu0 0
  %134 = vmatpush2.bf16.msra.mxu0 0
  %135 = vmatprep.subr.bf16.mxu0 0
  %136 = vmatpush2.bf16.msra.mxu0 0
  %137 = vmatprep.subr.bf16.mxu0 0
  %138 = vmatpush2.bf16.msra.mxu0 0
  %139 = vmatprep.subr.bf16.mxu0 0
  %140 = vmatpush2.bf16.msra.mxu0 0
  %141 = vmatprep.subr.bf16.mxu0 0
  %142 = vmatpush2.bf16.msra.mxu0 0
  %143 = vmatprep.subr.bf16.mxu0 0
  %144 = vmatpush2.bf16.msra.mxu0 0
  %145 = vmatprep.subr.bf16.mxu0 0
  %146 = vmatpush2.bf16.msra.mxu0 0
  %147 = vmatprep.mubr.bf16.mxu0 0
  %148 = vmatmul.mubr.bf16.gmra.mxu0 %v113
  %v149 = vpop.f32.mrf.mxu0
  %v150 = vadd.f32 %v50, %v149
  %v151 = vpop.f32.mrf.mxu0
  %v152 = vpop.f32.mrf.mxu0
  %v153 = vpop.f32.mrf.mxu0
  %154 = vdwg.mxu0
  %s155 = scalar_lea.vmem %s0, 16
  %v156 = vld [vmem:[%s155] sm:$0xff]
  %v157 = vpack.c.bf16 %v156, %v156
  %v159 = vsel %vm61, %v157, 0
  %161 = vmatprep.subr.bf16.mxu0 0
  %162 = vmatpush1.bf16.msra.mxu0 0
  %163 = vmatprep.subr.bf16.mxu0 0
  %164 = vmatpush1.bf16.msra.mxu0 0
  %165 = vmatprep.subr.bf16.mxu0 0
  %166 = vmatpush1.bf16.msra.mxu0 0
  %167 = vmatprep.subr.bf16.mxu0 0
  %168 = vmatpush1.bf16.msra.mxu0 0
  %169 = vmatprep.subr.bf16.mxu0 0
  %170 = vmatpush1.bf16.msra.mxu0 0
  %171 = vmatprep.subr.bf16.mxu0 0
  %172 = vmatpush1.bf16.msra.mxu0 0
  %173 = vmatprep.subr.bf16.mxu0 0
  %174 = vmatpush1.bf16.msra.mxu0 0
  %175 = vmatprep.subr.bf16.mxu0 0
  %176 = vmatpush1.bf16.msra.mxu0 %v67
  %177 = vmatprep.subr.bf16.mxu0 0
  %178 = vmatpush2.bf16.msra.mxu0 0
  %179 = vmatprep.subr.bf16.mxu0 0
  %180 = vmatpush2.bf16.msra.mxu0 0
  %181 = vmatprep.subr.bf16.mxu0 0
  %182 = vmatpush2.bf16.msra.mxu0 0
  %183 = vmatprep.subr.bf16.mxu0 0
  %184 = vmatpush2.bf16.msra.mxu0 0
  %185 = vmatprep.subr.bf16.mxu0 0
  %186 = vmatpush2.bf16.msra.mxu0 0
  %187 = vmatprep.subr.bf16.mxu0 0
  %188 = vmatpush2.bf16.msra.mxu0 0
  %189 = vmatprep.subr.bf16.mxu0 0
  %190 = vmatpush2.bf16.msra.mxu0 0
  %191 = vmatprep.subr.bf16.mxu0 0
  %192 = vmatpush2.bf16.msra.mxu0 0
  %193 = vmatprep.mubr.bf16.mxu0 0
  %194 = vmatmul.mubr.bf16.gmra.mxu0 %v159
  %v195 = vpop.f32.mrf.mxu0
  %v196 = vadd.f32 %v50, %v195
  %v197 = vpop.f32.mrf.mxu0
  %v198 = vpop.f32.mrf.mxu0
  %v199 = vpop.f32.mrf.mxu0
  %200 = vdwg.mxu0
  %s201 = scalar_lea.vmem %s0, 24
  %v202 = vld [vmem:[%s201] sm:$0xff]
  %v203 = vpack.c.bf16 %v202, %v202
  %v205 = vsel %vm61, %v203, 0
  %207 = vmatprep.subr.bf16.mxu0 0
  %208 = vmatpush1.bf16.msra.mxu0 0
  %209 = vmatprep.subr.bf16.mxu0 0
  %210 = vmatpush1.bf16.msra.mxu0 0
  %211 = vmatprep.subr.bf16.mxu0 0
  %212 = vmatpush1.bf16.msra.mxu0 0
  %213 = vmatprep.subr.bf16.mxu0 0
  %214 = vmatpush1.bf16.msra.mxu0 0
  %215 = vmatprep.subr.bf16.mxu0 0
  %216 = vmatpush1.bf16.msra.mxu0 0
  %217 = vmatprep.subr.bf16.mxu0 0
  %218 = vmatpush1.bf16.msra.mxu0 0
  %219 = vmatprep.subr.bf16.mxu0 0
  %220 = vmatpush1.bf16.msra.mxu0 0
  %221 = vmatprep.subr.bf16.mxu0 0
  %222 = vmatpush1.bf16.msra.mxu0 %v67
  %223 = vmatprep.subr.bf16.mxu0 0
  %224 = vmatpush2.bf16.msra.mxu0 0
  %225 = vmatprep.subr.bf16.mxu0 0
  %226 = vmatpush2.bf16.msra.mxu0 0
  %227 = vmatprep.subr.bf16.mxu0 0
  %228 = vmatpush2.bf16.msra.mxu0 0
  %229 = vmatprep.subr.bf16.mxu0 0
  %230 = vmatpush2.bf16.msra.mxu0 0
  %231 = vmatprep.subr.bf16.mxu0 0
  %232 = vmatpush2.bf16.msra.mxu0 0
  %233 = vmatprep.subr.bf16.mxu0 0
  %234 = vmatpush2.bf16.msra.mxu0 0
  %235 = vmatprep.subr.bf16.mxu0 0
  %236 = vmatpush2.bf16.msra.mxu0 0
  %237 = vmatprep.subr.bf16.mxu0 0
  %238 = vmatpush2.bf16.msra.mxu0 0
  %239 = vmatprep.mubr.bf16.mxu0 0
  %240 = vmatmul.mubr.bf16.gmra.mxu0 %v205
  %v241 = vpop.f32.mrf.mxu0
  %v242 = vadd.f32 %v50, %v241
  %v243 = vpop.f32.mrf.mxu0
  %v244 = vpop.f32.mrf.mxu0
  %v245 = vpop.f32.mrf.mxu0
  %246 = vdwg.mxu0
  %s247 = scalar_lea.vmem %s0, 32
  %v248 = vld [vmem:[%s247] sm:$0xff]
  %v249 = vpack.c.bf16 %v248, %v248
  %v251 = vsel %vm61, %v249, 0
  %253 = vmatprep.subr.bf16.mxu0 0
  %254 = vmatpush1.bf16.msra.mxu0 0
  %255 = vmatprep.subr.bf16.mxu0 0
  %256 = vmatpush1.bf16.msra.mxu0 0
  %257 = vmatprep.subr.bf16.mxu0 0
  %258 = vmatpush1.bf16.msra.mxu0 0
  %259 = vmatprep.subr.bf16.mxu0 0
  %260 = vmatpush1.bf16.msra.mxu0 0
  %261 = vmatprep.subr.bf16.mxu0 0
  %262 = vmatpush1.bf16.msra.mxu0 0
  %263 = vmatprep.subr.bf16.mxu0 0
  %264 = vmatpush1.bf16.msra.mxu0 0
  %265 = vmatprep.subr.bf16.mxu0 0
  %266 = vmatpush1.bf16.msra.mxu0 0
  %267 = vmatprep.subr.bf16.mxu0 0
  %268 = vmatpush1.bf16.msra.mxu0 %v67
  %269 = vmatprep.subr.bf16.mxu0 0
  %270 = vmatpush2.bf16.msra.mxu0 0
  %271 = vmatprep.subr.bf16.mxu0 0
  %272 = vmatpush2.bf16.msra.mxu0 0
  %273 = vmatprep.subr.bf16.mxu0 0
  %274 = vmatpush2.bf16.msra.mxu0 0
  %275 = vmatprep.subr.bf16.mxu0 0
  %276 = vmatpush2.bf16.msra.mxu0 0
  %277 = vmatprep.subr.bf16.mxu0 0
  %278 = vmatpush2.bf16.msra.mxu0 0
  %279 = vmatprep.subr.bf16.mxu0 0
  %280 = vmatpush2.bf16.msra.mxu0 0
  %281 = vmatprep.subr.bf16.mxu0 0
  %282 = vmatpush2.bf16.msra.mxu0 0
  %283 = vmatprep.subr.bf16.mxu0 0
  %284 = vmatpush2.bf16.msra.mxu0 0
  %285 = vmatprep.mubr.bf16.mxu0 0
  %286 = vmatmul.mubr.bf16.gmra.mxu0 %v251
  %v287 = vpop.f32.mrf.mxu0
  %v288 = vadd.f32 %v50, %v287
  %v289 = vpop.f32.mrf.mxu0
  %v290 = vpop.f32.mrf.mxu0
  %v291 = vpop.f32.mrf.mxu0
  %292 = vdwg.mxu0
  %s293 = scalar_lea.vmem %s0, 40
  %v294 = vld [vmem:[%s293] sm:$0xff]
  %v295 = vpack.c.bf16 %v294, %v294
  %v297 = vsel %vm61, %v295, 0
  %299 = vmatprep.subr.bf16.mxu0 0
  %300 = vmatpush1.bf16.msra.mxu0 0
  %301 = vmatprep.subr.bf16.mxu0 0
  %302 = vmatpush1.bf16.msra.mxu0 0
  %303 = vmatprep.subr.bf16.mxu0 0
  %304 = vmatpush1.bf16.msra.mxu0 0
  %305 = vmatprep.subr.bf16.mxu0 0
  %306 = vmatpush1.bf16.msra.mxu0 0
  %307 = vmatprep.subr.bf16.mxu0 0
  %308 = vmatpush1.bf16.msra.mxu0 0
  %309 = vmatprep.subr.bf16.mxu0 0
  %310 = vmatpush1.bf16.msra.mxu0 0
  %311 = vmatprep.subr.bf16.mxu0 0
  %312 = vmatpush1.bf16.msra.mxu0 0
  %313 = vmatprep.subr.bf16.mxu0 0
  %314 = vmatpush1.bf16.msra.mxu0 %v67
  %315 = vmatprep.subr.bf16.mxu0 0
  %316 = vmatpush2.bf16.msra.mxu0 0
  %317 = vmatprep.subr.bf16.mxu0 0
  %318 = vmatpush2.bf16.msra.mxu0 0
  %319 = vmatprep.subr.bf16.mxu0 0
  %320 = vmatpush2.bf16.msra.mxu0 0
  %321 = vmatprep.subr.bf16.mxu0 0
  %322 = vmatpush2.bf16.msra.mxu0 0
  %323 = vmatprep.subr.bf16.mxu0 0
  %324 = vmatpush2.bf16.msra.mxu0 0
  %325 = vmatprep.subr.bf16.mxu0 0
  %326 = vmatpush2.bf16.msra.mxu0 0
  %327 = vmatprep.subr.bf16.mxu0 0
  %328 = vmatpush2.bf16.msra.mxu0 0
  %329 = vmatprep.subr.bf16.mxu0 0
  %330 = vmatpush2.bf16.msra.mxu0 0
  %331 = vmatprep.mubr.bf16.mxu0 0
  %332 = vmatmul.mubr.bf16.gmra.mxu0 %v297
  %v333 = vpop.f32.mrf.mxu0
  %v334 = vadd.f32 %v50, %v333
  %v335 = vpop.f32.mrf.mxu0
  %v336 = vpop.f32.mrf.mxu0
  %v337 = vpop.f32.mrf.mxu0
  %338 = vdwg.mxu0
  %s339 = scalar_lea.vmem %s0, 48
  %v340 = vld [vmem:[%s339] sm:$0xff]
  %v341 = vpack.c.bf16 %v340, %v340
  %v343 = vsel %vm61, %v341, 0
  %345 = vmatprep.subr.bf16.mxu0 0
  %346 = vmatpush1.bf16.msra.mxu0 0
  %347 = vmatprep.subr.bf16.mxu0 0
  %348 = vmatpush1.bf16.msra.mxu0 0
  %349 = vmatprep.subr.bf16.mxu0 0
  %350 = vmatpush1.bf16.msra.mxu0 0
  %351 = vmatprep.subr.bf16.mxu0 0
  %352 = vmatpush1.bf16.msra.mxu0 0
  %353 = vmatprep.subr.bf16.mxu0 0
  %354 = vmatpush1.bf16.msra.mxu0 0
  %355 = vmatprep.subr.bf16.mxu0 0
  %356 = vmatpush1.bf16.msra.mxu0 0
  %357 = vmatprep.subr.bf16.mxu0 0
  %358 = vmatpush1.bf16.msra.mxu0 0
  %359 = vmatprep.subr.bf16.mxu0 0
  %360 = vmatpush1.bf16.msra.mxu0 %v67
  %361 = vmatprep.subr.bf16.mxu0 0
  %362 = vmatpush2.bf16.msra.mxu0 0
  %363 = vmatprep.subr.bf16.mxu0 0
  %364 = vmatpush2.bf16.msra.mxu0 0
  %365 = vmatprep.subr.bf16.mxu0 0
  %366 = vmatpush2.bf16.msra.mxu0 0
  %367 = vmatprep.subr.bf16.mxu0 0
  %368 = vmatpush2.bf16.msra.mxu0 0
  %369 = vmatprep.subr.bf16.mxu0 0
  %370 = vmatpush2.bf16.msra.mxu0 0
  %371 = vmatprep.subr.bf16.mxu0 0
  %372 = vmatpush2.bf16.msra.mxu0 0
  %373 = vmatprep.subr.bf16.mxu0 0
  %374 = vmatpush2.bf16.msra.mxu0 0
  %375 = vmatprep.subr.bf16.mxu0 0
  %376 = vmatpush2.bf16.msra.mxu0 0
  %377 = vmatprep.mubr.bf16.mxu0 0
  %378 = vmatmul.mubr.bf16.gmra.mxu0 %v343
  %v379 = vpop.f32.mrf.mxu0
  %v380 = vadd.f32 %v50, %v379
  %v381 = vpop.f32.mrf.mxu0
  %v382 = vpop.f32.mrf.mxu0
  %v383 = vpop.f32.mrf.mxu0
  %384 = vdwg.mxu0
  %s385 = scalar_lea.vmem %s0, 56
  %v386 = vld [vmem:[%s385] sm:$0xff]
  %v387 = vpack.c.bf16 %v386, %v386
  %v389 = vsel %vm61, %v387, 0
  %391 = vmatprep.subr.bf16.mxu0 0
  %392 = vmatpush1.bf16.msra.mxu0 0
  %393 = vmatprep.subr.bf16.mxu0 0
  %394 = vmatpush1.bf16.msra.mxu0 0
  %395 = vmatprep.subr.bf16.mxu0 0
  %396 = vmatpush1.bf16.msra.mxu0 0
  %397 = vmatprep.subr.bf16.mxu0 0
  %398 = vmatpush1.bf16.msra.mxu0 0
  %399 = vmatprep.subr.bf16.mxu0 0
  %400 = vmatpush1.bf16.msra.mxu0 0
  %401 = vmatprep.subr.bf16.mxu0 0
  %402 = vmatpush1.bf16.msra.mxu0 0
  %403 = vmatprep.subr.bf16.mxu0 0
  %404 = vmatpush1.bf16.msra.mxu0 0
  %405 = vmatprep.subr.bf16.mxu0 0
  %406 = vmatpush1.bf16.msra.mxu0 %v67
  %407 = vmatprep.subr.bf16.mxu0 0
  %408 = vmatpush2.bf16.msra.mxu0 0
  %409 = vmatprep.subr.bf16.mxu0 0
  %410 = vmatpush2.bf16.msra.mxu0 0
  %411 = vmatprep.subr.bf16.mxu0 0
  %412 = vmatpush2.bf16.msra.mxu0 0
  %413 = vmatprep.subr.bf16.mxu0 0
  %414 = vmatpush2.bf16.msra.mxu0 0
  %415 = vmatprep.subr.bf16.mxu0 0
  %416 = vmatpush2.bf16.msra.mxu0 0
  %417 = vmatprep.subr.bf16.mxu0 0
  %418 = vmatpush2.bf16.msra.mxu0 0
  %419 = vmatprep.subr.bf16.mxu0 0
  %420 = vmatpush2.bf16.msra.mxu0 0
  %421 = vmatprep.subr.bf16.mxu0 0
  %422 = vmatpush2.bf16.msra.mxu0 0
  %423 = vmatprep.mubr.bf16.mxu0 0
  %424 = vmatmul.mubr.bf16.gmra.mxu0 %v389
  %v425 = vpop.f32.mrf.mxu0
  %v426 = vadd.f32 %v50, %v425
  %v427 = vpop.f32.mrf.mxu0
  %v428 = vpop.f32.mrf.mxu0
  %v429 = vpop.f32.mrf.mxu0
  %430 = vdwg.mxu0
  %v435 = vunpack.c.l.b16 %v32
  %v436 = vunpack.c.l.b16 %v33
  %v437 = vunpack.c.l.b16 %v34
  %v438 = vunpack.c.l.b16 %v35
  %v439 = vpack.c.b16 %v436, %v435
  %v440 = vpack.c.b16 %v438, %v437
  %vm443 = vcmask 261120
  %v445 = vsel %vm443, 0, 0
  %447 = vmatprep.subr.bf16.mxu0 0
  %448 = vmatpush1.bf16.msra.mxu0 0
  %449 = vmatprep.subr.bf16.mxu0 0
  %450 = vmatpush1.bf16.msra.mxu0 0
  %451 = vmatprep.subr.bf16.mxu0 0
  %452 = vmatpush1.bf16.msra.mxu0 0
  %453 = vmatprep.subr.bf16.mxu0 0
  %454 = vmatpush1.bf16.msra.mxu0 0
  %455 = vmatprep.subr.bf16.mxu0 0
  %456 = vmatpush1.bf16.msra.mxu0 0
  %457 = vmatprep.subr.bf16.mxu0 0
  %458 = vmatpush1.bf16.msra.mxu0 0
  %459 = vmatprep.subr.bf16.mxu0 0
  %460 = vmatpush1.bf16.msra.mxu0 %v440
  %461 = vmatprep.subr.bf16.mxu0 0
  %462 = vmatpush1.bf16.msra.mxu0 %v439
  %463 = vmatprep.subr.bf16.mxu0 0
  %464 = vmatpush2.bf16.msra.mxu0 0
  %465 = vmatprep.subr.bf16.mxu0 0
  %466 = vmatpush2.bf16.msra.mxu0 0
  %467 = vmatprep.subr.bf16.mxu0 0
  %468 = vmatpush2.bf16.msra.mxu0 0
  %469 = vmatprep.subr.bf16.mxu0 0
  %470 = vmatpush2.bf16.msra.mxu0 0
  %471 = vmatprep.subr.bf16.mxu0 0
  %472 = vmatpush2.bf16.msra.mxu0 0
  %473 = vmatprep.subr.bf16.mxu0 0
  %474 = vmatpush2.bf16.msra.mxu0 0
  %475 = vmatprep.subr.bf16.mxu0 0
  %476 = vmatpush2.bf16.msra.mxu0 0
  %477 = vmatprep.subr.bf16.mxu0 0
  %478 = vmatpush2.bf16.msra.mxu0 0
  %479 = vmatprep.mubr.bf16.mxu0 0
  %480 = vmatmul.mubr.bf16.gmra.mxu0 %v445
  %v481 = vpop.f32.mrf.mxu0
  %v482 = vadd.f32 %v104, %v481
  %v483 = vpop.f32.mrf.mxu0
  %v484 = vpop.f32.mrf.mxu0
  %v485 = vpop.f32.mrf.mxu0
  %486 = vdwg.mxu0
  %v487 = vxor.u32 %v482, 2147483648
  %v488 = vmul.f32 %v487, 1.442695
  %v489 = vpow.pop %v488
  %v490 = vadd.f32 %v489, 1.0
  %v491 = vrcp.pop %v490
  %v492 = vmul.f32 1.0, %v491
  %v493 = vmul.f32 %v492, 2.0
  %v494 = vsub.f32 %v493, 1.0
  %v495 = vmul.f32 %v492, 0.0
  %497 = vrot.lane.b32.xlu0 %v494, 64
  %v498 = vpop.permute.xlu0 %497
  %v500 = vmul.f32 %v492, %v498
  %502 = vrot.lane.b32.xlu0 %v500, 32
  %v503 = vpop.permute.xlu0 %502
  %v505 = vadd.f32 %v495, %v503
  %v506 = vtanh.pop %v505
  %508 = vrot.lane.b32.xlu0 %v506, 64
  %v509 = vpop.permute.xlu0 %508
  %v511 = vmul.f32 %v492, %v509
  %v512 = vpack.c.bf16 %v511, %v511
  %514 = vrot.lane.b32.xlu0 %v512, 32
  %v515 = vpop.permute.xlu0 %514
  %v517 = vsel %vm443, %v515, 0
  %519 = vmatprep.subr.bf16.mxu0 0
  %520 = vmatpush1.bf16.msra.mxu0 0
  %521 = vmatprep.subr.bf16.mxu0 0
  %522 = vmatpush1.bf16.msra.mxu0 0
  %523 = vmatprep.subr.bf16.mxu0 0
  %524 = vmatpush1.bf16.msra.mxu0 0
  %525 = vmatprep.subr.bf16.mxu0 0
  %526 = vmatpush1.bf16.msra.mxu0 0
  %527 = vmatprep.subr.bf16.mxu0 0
  %528 = vmatpush1.bf16.msra.mxu0 0
  %529 = vmatprep.subr.bf16.mxu0 0
  %530 = vmatpush1.bf16.msra.mxu0 0
  %531 = vmatprep.subr.bf16.mxu0 0
  %532 = vmatpush1.bf16.msra.mxu0 %v440
  %533 = vmatprep.subr.bf16.mxu0 0
  %534 = vmatpush1.bf16.msra.mxu0 %v439
  %535 = vmatprep.subr.bf16.mxu0 0
  %536 = vmatpush2.bf16.msra.mxu0 0
  %537 = vmatprep.subr.bf16.mxu0 0
  %538 = vmatpush2.bf16.msra.mxu0 0
  %539 = vmatprep.subr.bf16.mxu0 0
  %540 = vmatpush2.bf16.msra.mxu0 0
  %541 = vmatprep.subr.bf16.mxu0 0
  %542 = vmatpush2.bf16.msra.mxu0 0
  %543 = vmatprep.subr.bf16.mxu0 0
  %544 = vmatpush2.bf16.msra.mxu0 0
  %545 = vmatprep.subr.bf16.mxu0 0
  %546 = vmatpush2.bf16.msra.mxu0 0
  %547 = vmatprep.subr.bf16.mxu0 0
  %548 = vmatpush2.bf16.msra.mxu0 0
  %549 = vmatprep.subr.bf16.mxu0 0
  %550 = vmatpush2.bf16.msra.mxu0 0
  %551 = vmatprep.mubr.bf16.mxu0 0
  %552 = vmatmul.mubr.bf16.gmra.mxu0 %v517
  %v553 = vpop.f32.mrf.mxu0
  %v554 = vadd.f32 %v150, %v553
  %v555 = vpop.f32.mrf.mxu0
  %v556 = vpop.f32.mrf.mxu0
  %v557 = vpop.f32.mrf.mxu0
  %558 = vdwg.mxu0
  %v559 = vxor.u32 %v554, 2147483648
  %v560 = vmul.f32 %v559, 1.442695
  %v561 = vpow.pop %v560
  %v562 = vadd.f32 %v561, 1.0
  %v563 = vrcp.pop %v562
  %v564 = vmul.f32 1.0, %v563
  %v565 = vmul.f32 %v564, 2.0
  %v566 = vsub.f32 %v565, 1.0
  %v567 = vmul.f32 %v564, %v505
  %569 = vrot.lane.b32.xlu0 %v566, 64
  %v570 = vpop.permute.xlu0 %569
  %v572 = vmul.f32 %v564, %v570
  %574 = vrot.lane.b32.xlu0 %v572, 32
  %v575 = vpop.permute.xlu0 %574
  %v577 = vadd.f32 %v567, %v575
  %v578 = vtanh.pop %v577
  %580 = vrot.lane.b32.xlu0 %v578, 64
  %v581 = vpop.permute.xlu0 %580
  %v583 = vmul.f32 %v564, %v581
  %585 = vrot.lane.b32.xlu0 %v511, 32
  %v586 = vpop.permute.xlu0 %585
  %v588 = vsel %vm443, %v586, 0.0
  %v589 = vpack.c.bf16 %v588, %v588
  %v598 = vunpack.c.l.b16 %v37
  %v599 = vunpack.c.l.b16 %v38
  %v600 = vunpack.c.l.b16 %v39
  %v601 = vunpack.c.l.b16 %v40
  %v602 = vunpack.c.l.b16 %v41
  %v603 = vunpack.c.l.b16 %v42
  %v604 = vunpack.c.l.b16 %v43
  %v605 = vunpack.c.l.b16 %v44
  %v606 = vpack.c.b16 %v599, %v598
  %v607 = vpack.c.b16 %v601, %v600
  %v608 = vpack.c.b16 %v603, %v602
  %v609 = vpack.c.b16 %v605, %v604
  %vm614 = vcmask 523264
  %v616 = vsel %vm614, %v589, 0
  %618 = vmatprep.subr.bf16.mxu0 0
  %619 = vmatpush1.bf16.msra.mxu0 0
  %620 = vmatprep.subr.bf16.mxu0 0
  %621 = vmatpush1.bf16.msra.mxu0 0
  %622 = vmatprep.subr.bf16.mxu0 0
  %623 = vmatpush1.bf16.msra.mxu0 0
  %624 = vmatprep.subr.bf16.mxu0 0
  %625 = vmatpush1.bf16.msra.mxu0 0
  %626 = vmatprep.subr.bf16.mxu0 0
  %627 = vmatpush1.bf16.msra.mxu0 %v609
  %628 = vmatprep.subr.bf16.mxu0 0
  %629 = vmatpush1.bf16.msra.mxu0 %v608
  %630 = vmatprep.subr.bf16.mxu0 0
  %631 = vmatpush1.bf16.msra.mxu0 %v607
  %632 = vmatprep.subr.bf16.mxu0 0
  %633 = vmatpush1.bf16.msra.mxu0 %v606
  %634 = vmatprep.subr.bf16.mxu0 0
  %635 = vmatpush2.bf16.msra.mxu0 0
  %636 = vmatprep.subr.bf16.mxu0 0
  %637 = vmatpush2.bf16.msra.mxu0 0
  %638 = vmatprep.subr.bf16.mxu0 0
  %639 = vmatpush2.bf16.msra.mxu0 0
  %640 = vmatprep.subr.bf16.mxu0 0
  %641 = vmatpush2.bf16.msra.mxu0 0
  %642 = vmatprep.subr.bf16.mxu0 0
  %643 = vmatpush2.bf16.msra.mxu0 0
  %644 = vmatprep.subr.bf16.mxu0 0
  %645 = vmatpush2.bf16.msra.mxu0 0
  %646 = vmatprep.subr.bf16.mxu0 0
  %647 = vmatpush2.bf16.msra.mxu0 0
  %648 = vmatprep.subr.bf16.mxu0 0
  %649 = vmatpush2.bf16.msra.mxu0 0
  %650 = vmatprep.mubr.bf16.mxu0 0
  %651 = vmatmul.mubr.bf16.gmra.mxu0 %v616
  %v652 = vpop.f32.mrf.mxu0
  %v653 = vadd.f32 %v57, %v652
  %v654 = vpop.f32.mrf.mxu0
  %v655 = vpop.f32.mrf.mxu0
  %v656 = vpop.f32.mrf.mxu0
  %657 = vdwg.mxu0
  %v658 = vxor.u32 %v653, 2147483648
  %v659 = vmul.f32 %v658, 1.442695
  %v660 = vpow.pop %v659
  %v661 = vadd.f32 %v660, 1.0
  %v662 = vrcp.pop %v661
  %v663 = vmul.f32 1.0, %v662
  %v664 = vmul.f32 %v663, 2.0
  %v665 = vsub.f32 %v664, 1.0
  %v666 = vmul.f32 %v663, 0.0
  %668 = vrot.lane.b32.xlu0 %v665, 64
  %v669 = vpop.permute.xlu0 %668
  %v671 = vmul.f32 %v663, %v669
  %673 = vrot.lane.b32.xlu0 %v671, 32
  %v674 = vpop.permute.xlu0 %673
  %v676 = vadd.f32 %v666, %v674
  %v677 = vtanh.pop %v676
  %679 = vrot.lane.b32.xlu0 %v677, 64
  %v680 = vpop.permute.xlu0 %679
  %v682 = vmul.f32 %v663, %v680
  %v683 = vpack.c.bf16 %v583, %v583
  %685 = vrot.lane.b32.xlu0 %v683, 32
  %v686 = vpop.permute.xlu0 %685
  %v688 = vsel %vm443, %v686, 0
  %690 = vmatprep.subr.bf16.mxu0 0
  %691 = vmatpush1.bf16.msra.mxu0 0
  %692 = vmatprep.subr.bf16.mxu0 0
  %693 = vmatpush1.bf16.msra.mxu0 0
  %694 = vmatprep.subr.bf16.mxu0 0
  %695 = vmatpush1.bf16.msra.mxu0 0
  %696 = vmatprep.subr.bf16.mxu0 0
  %697 = vmatpush1.bf16.msra.mxu0 0
  %698 = vmatprep.subr.bf16.mxu0 0
  %699 = vmatpush1.bf16.msra.mxu0 0
  %700 = vmatprep.subr.bf16.mxu0 0
  %701 = vmatpush1.bf16.msra.mxu0 0
  %702 = vmatprep.subr.bf16.mxu0 0
  %703 = vmatpush1.bf16.msra.mxu0 %v440
  %704 = vmatprep.subr.bf16.mxu0 0
  %705 = vmatpush1.bf16.msra.mxu0 %v439
  %706 = vmatprep.subr.bf16.mxu0 0
  %707 = vmatpush2.bf16.msra.mxu0 0
  %708 = vmatprep.subr.bf16.mxu0 0
  %709 = vmatpush2.bf16.msra.mxu0 0
  %710 = vmatprep.subr.bf16.mxu0 0
  %711 = vmatpush2.bf16.msra.mxu0 0
  %712 = vmatprep.subr.bf16.mxu0 0
  %713 = vmatpush2.bf16.msra.mxu0 0
  %714 = vmatprep.subr.bf16.mxu0 0
  %715 = vmatpush2.bf16.msra.mxu0 0
  %716 = vmatprep.subr.bf16.mxu0 0
  %717 = vmatpush2.bf16.msra.mxu0 0
  %718 = vmatprep.subr.bf16.mxu0 0
  %719 = vmatpush2.bf16.msra.mxu0 0
  %720 = vmatprep.subr.bf16.mxu0 0
  %721 = vmatpush2.bf16.msra.mxu0 0
  %722 = vmatprep.mubr.bf16.mxu0 0
  %723 = vmatmul.mubr.bf16.gmra.mxu0 %v688
  %v724 = vpop.f32.mrf.mxu0
  %v725 = vadd.f32 %v196, %v724
  %v726 = vpop.f32.mrf.mxu0
  %v727 = vpop.f32.mrf.mxu0
  %v728 = vpop.f32.mrf.mxu0
  %729 = vdwg.mxu0
  %v730 = vxor.u32 %v725, 2147483648
  %v731 = vmul.f32 %v730, 1.442695
  %v732 = vpow.pop %v731
  %v733 = vadd.f32 %v732, 1.0
  %v734 = vrcp.pop %v733
  %v735 = vmul.f32 1.0, %v734
  %v736 = vmul.f32 %v735, 2.0
  %v737 = vsub.f32 %v736, 1.0
  %v738 = vmul.f32 %v735, %v577
  %740 = vrot.lane.b32.xlu0 %v737, 64
  %v741 = vpop.permute.xlu0 %740
  %v743 = vmul.f32 %v735, %v741
  %745 = vrot.lane.b32.xlu0 %v743, 32
  %v746 = vpop.permute.xlu0 %745
  %v748 = vadd.f32 %v738, %v746
  %v749 = vtanh.pop %v748
  %751 = vrot.lane.b32.xlu0 %v749, 64
  %v752 = vpop.permute.xlu0 %751
  %v754 = vmul.f32 %v735, %v752
  %756 = vrot.lane.b32.xlu0 %v583, 32
  %v757 = vpop.permute.xlu0 %756
  %760 = vrot.lane.b32.xlu0 %v682, 64
  %v761 = vpop.permute.xlu0 %760
  %v763 = vsel %vm443, %v757, %v761
  %v764 = vpack.c.bf16 %v763, %v763
  %v766 = vsel %vm614, %v764, 0
  %768 = vmatprep.subr.bf16.mxu0 0
  %769 = vmatpush1.bf16.msra.mxu0 0
  %770 = vmatprep.subr.bf16.mxu0 0
  %771 = vmatpush1.bf16.msra.mxu0 0
  %772 = vmatprep.subr.bf16.mxu0 0
  %773 = vmatpush1.bf16.msra.mxu0 0
  %774 = vmatprep.subr.bf16.mxu0 0
  %775 = vmatpush1.bf16.msra.mxu0 0
  %776 = vmatprep.subr.bf16.mxu0 0
  %777 = vmatpush1.bf16.msra.mxu0 %v609
  %778 = vmatprep.subr.bf16.mxu0 0
  %779 = vmatpush1.bf16.msra.mxu0 %v608
  %780 = vmatprep.subr.bf16.mxu0 0
  %781 = vmatpush1.bf16.msra.mxu0 %v607
  %782 = vmatprep.subr.bf16.mxu0 0
  %783 = vmatpush1.bf16.msra.mxu0 %v606
  %784 = vmatprep.subr.bf16.mxu0 0
  %785 = vmatpush2.bf16.msra.mxu0 0
  %786 = vmatprep.subr.bf16.mxu0 0
  %787 = vmatpush2.bf16.msra.mxu0 0
  %788 = vmatprep.subr.bf16.mxu0 0
  %789 = vmatpush2.bf16.msra.mxu0 0
  %790 = vmatprep.subr.bf16.mxu0 0
  %791 = vmatpush2.bf16.msra.mxu0 0
  %792 = vmatprep.subr.bf16.mxu0 0
  %793 = vmatpush2.bf16.msra.mxu0 0
  %794 = vmatprep.subr.bf16.mxu0 0
  %795 = vmatpush2.bf16.msra.mxu0 0
  %796 = vmatprep.subr.bf16.mxu0 0
  %797 = vmatpush2.bf16.msra.mxu0 0
  %798 = vmatprep.subr.bf16.mxu0 0
  %799 = vmatpush2.bf16.msra.mxu0 0
  %800 = vmatprep.mubr.bf16.mxu0 0
  %801 = vmatmul.mubr.bf16.gmra.mxu0 %v766
  %v802 = vpop.f32.mrf.mxu0
  %v803 = vadd.f32 %v57, %v802
  %v804 = vpop.f32.mrf.mxu0
  %v805 = vpop.f32.mrf.mxu0
  %v806 = vpop.f32.mrf.mxu0
  %807 = vdwg.mxu0
  %v808 = vxor.u32 %v803, 2147483648
  %v809 = vmul.f32 %v808, 1.442695
  %v810 = vpow.pop %v809
  %v811 = vadd.f32 %v810, 1.0
  %v812 = vrcp.pop %v811
  %v813 = vmul.f32 1.0, %v812
  %v814 = vmul.f32 %v813, 2.0
  %v815 = vsub.f32 %v814, 1.0
  %v816 = vmul.f32 %v813, %v676
  %818 = vrot.lane.b32.xlu0 %v815, 64
  %v819 = vpop.permute.xlu0 %818
  %v821 = vmul.f32 %v813, %v819
  %823 = vrot.lane.b32.xlu0 %v821, 32
  %v824 = vpop.permute.xlu0 %823
  %v826 = vadd.f32 %v816, %v824
  %v827 = vtanh.pop %v826
  %829 = vrot.lane.b32.xlu0 %v827, 64
  %v830 = vpop.permute.xlu0 %829
  %v832 = vmul.f32 %v813, %v830
  %v833 = vpack.c.bf16 %v754, %v754
  %835 = vrot.lane.b32.xlu0 %v833, 32
  %v836 = vpop.permute.xlu0 %835
  %v838 = vsel %vm443, %v836, 0
  %840 = vmatprep.subr.bf16.mxu0 0
  %841 = vmatpush1.bf16.msra.mxu0 0
  %842 = vmatprep.subr.bf16.mxu0 0
  %843 = vmatpush1.bf16.msra.mxu0 0
  %844 = vmatprep.subr.bf16.mxu0 0
  %845 = vmatpush1.bf16.msra.mxu0 0
  %846 = vmatprep.subr.bf16.mxu0 0
  %847 = vmatpush1.bf16.msra.mxu0 0
  %848 = vmatprep.subr.bf16.mxu0 0
  %849 = vmatpush1.bf16.msra.mxu0 0
  %850 = vmatprep.subr.bf16.mxu0 0
  %851 = vmatpush1.bf16.msra.mxu0 0
  %852 = vmatprep.subr.bf16.mxu0 0
  %853 = vmatpush1.bf16.msra.mxu0 %v440
  %854 = vmatprep.subr.bf16.mxu0 0
  %855 = vmatpush1.bf16.msra.mxu0 %v439
  %856 = vmatprep.subr.bf16.mxu0 0
  %857 = vmatpush2.bf16.msra.mxu0 0
  %858 = vmatprep.subr.bf16.mxu0 0
  %859 = vmatpush2.bf16.msra.mxu0 0
  %860 = vmatprep.subr.bf16.mxu0 0
  %861 = vmatpush2.bf16.msra.mxu0 0
  %862 = vmatprep.subr.bf16.mxu0 0
  %863 = vmatpush2.bf16.msra.mxu0 0
  %864 = vmatprep.subr.bf16.mxu0 0
  %865 = vmatpush2.bf16.msra.mxu0 0
  %866 = vmatprep.subr.bf16.mxu0 0
  %867 = vmatpush2.bf16.msra.mxu0 0
  %868 = vmatprep.subr.bf16.mxu0 0
  %869 = vmatpush2.bf16.msra.mxu0 0
  %870 = vmatprep.subr.bf16.mxu0 0
  %871 = vmatpush2.bf16.msra.mxu0 0
  %872 = vmatprep.mubr.bf16.mxu0 0
  %873 = vmatmul.mubr.bf16.gmra.mxu0 %v838
  %v874 = vpop.f32.mrf.mxu0
  %v875 = vadd.f32 %v242, %v874
  %v876 = vpop.f32.mrf.mxu0
  %v877 = vpop.f32.mrf.mxu0
  %v878 = vpop.f32.mrf.mxu0
  %879 = vdwg.mxu0
  %v880 = vxor.u32 %v875, 2147483648
  %v881 = vmul.f32 %v880, 1.442695
  %v882 = vpow.pop %v881
  %v883 = vadd.f32 %v882, 1.0
  %v884 = vrcp.pop %v883
  %v885 = vmul.f32 1.0, %v884
  %v886 = vmul.f32 %v885, 2.0
  %v887 = vsub.f32 %v886, 1.0
  %v888 = vmul.f32 %v885, %v748
  %890 = vrot.lane.b32.xlu0 %v887, 64
  %v891 = vpop.permute.xlu0 %890
  %v893 = vmul.f32 %v885, %v891
  %895 = vrot.lane.b32.xlu0 %v893, 32
  %v896 = vpop.permute.xlu0 %895
  %v898 = vadd.f32 %v888, %v896
  %v899 = vtanh.pop %v898
  %901 = vrot.lane.b32.xlu0 %v899, 64
  %v902 = vpop.permute.xlu0 %901
  %v904 = vmul.f32 %v885, %v902
  %906 = vrot.lane.b32.xlu0 %v754, 32
  %v907 = vpop.permute.xlu0 %906
  %910 = vrot.lane.b32.xlu0 %v832, 64
  %v911 = vpop.permute.xlu0 %910
  %v913 = vsel %vm443, %v907, %v911
  %v914 = vpack.c.bf16 %v913, %v913
  %v916 = vsel %vm614, %v914, 0
  %918 = vmatprep.subr.bf16.mxu0 0
  %919 = vmatpush1.bf16.msra.mxu0 0
  %920 = vmatprep.subr.bf16.mxu0 0
  %921 = vmatpush1.bf16.msra.mxu0 0
  %922 = vmatprep.subr.bf16.mxu0 0
  %923 = vmatpush1.bf16.msra.mxu0 0
  %924 = vmatprep.subr.bf16.mxu0 0
  %925 = vmatpush1.bf16.msra.mxu0 0
  %926 = vmatprep.subr.bf16.mxu0 0
  %927 = vmatpush1.bf16.msra.mxu0 %v609
  %928 = vmatprep.subr.bf16.mxu0 0
  %929 = vmatpush1.bf16.msra.mxu0 %v608
  %930 = vmatprep.subr.bf16.mxu0 0
  %931 = vmatpush1.bf16.msra.mxu0 %v607
  %932 = vmatprep.subr.bf16.mxu0 0
  %933 = vmatpush1.bf16.msra.mxu0 %v606
  %934 = vmatprep.subr.bf16.mxu0 0
  %935 = vmatpush2.bf16.msra.mxu0 0
  %936 = vmatprep.subr.bf16.mxu0 0
  %937 = vmatpush2.bf16.msra.mxu0 0
  %938 = vmatprep.subr.bf16.mxu0 0
  %939 = vmatpush2.bf16.msra.mxu0 0
  %940 = vmatprep.subr.bf16.mxu0 0
  %941 = vmatpush2.bf16.msra.mxu0 0
  %942 = vmatprep.subr.bf16.mxu0 0
  %943 = vmatpush2.bf16.msra.mxu0 0
  %944 = vmatprep.subr.bf16.mxu0 0
  %945 = vmatpush2.bf16.msra.mxu0 0
  %946 = vmatprep.subr.bf16.mxu0 0
  %947 = vmatpush2.bf16.msra.mxu0 0
  %948 = vmatprep.subr.bf16.mxu0 0
  %949 = vmatpush2.bf16.msra.mxu0 0
  %950 = vmatprep.mubr.bf16.mxu0 0
  %951 = vmatmul.mubr.bf16.gmra.mxu0 %v916
  %v952 = vpop.f32.mrf.mxu0
  %v953 = vadd.f32 %v57, %v952
  %v954 = vpop.f32.mrf.mxu0
  %v955 = vpop.f32.mrf.mxu0
  %v956 = vpop.f32.mrf.mxu0
  %957 = vdwg.mxu0
  %v958 = vxor.u32 %v953, 2147483648
  %v959 = vmul.f32 %v958, 1.442695
  %v960 = vpow.pop %v959
  %v961 = vadd.f32 %v960, 1.0
  %v962 = vrcp.pop %v961
  %v963 = vmul.f32 1.0, %v962
  %v964 = vmul.f32 %v963, 2.0
  %v965 = vsub.f32 %v964, 1.0
  %v966 = vmul.f32 %v963, %v826
  %968 = vrot.lane.b32.xlu0 %v965, 64
  %v969 = vpop.permute.xlu0 %968
  %v971 = vmul.f32 %v963, %v969
  %973 = vrot.lane.b32.xlu0 %v971, 32
  %v974 = vpop.permute.xlu0 %973
  %v976 = vadd.f32 %v966, %v974
  %v977 = vtanh.pop %v976
  %979 = vrot.lane.b32.xlu0 %v977, 64
  %v980 = vpop.permute.xlu0 %979
  %v982 = vmul.f32 %v963, %v980
  %v983 = vpack.c.bf16 %v904, %v904
  %985 = vrot.lane.b32.xlu0 %v983, 32
  %v986 = vpop.permute.xlu0 %985
  %v988 = vsel %vm443, %v986, 0
  %990 = vmatprep.subr.bf16.mxu0 0
  %991 = vmatpush1.bf16.msra.mxu0 0
  %992 = vmatprep.subr.bf16.mxu0 0
  %993 = vmatpush1.bf16.msra.mxu0 0
  %994 = vmatprep.subr.bf16.mxu0 0
  %995 = vmatpush1.bf16.msra.mxu0 0
  %996 = vmatprep.subr.bf16.mxu0 0
  %997 = vmatpush1.bf16.msra.mxu0 0
  %998 = vmatprep.subr.bf16.mxu0 0
  %999 = vmatpush1.bf16.msra.mxu0 0
  %1000 = vmatprep.subr.bf16.mxu0 0
  %1001 = vmatpush1.bf16.msra.mxu0 0
  %1002 = vmatprep.subr.bf16.mxu0 0
  %1003 = vmatpush1.bf16.msra.mxu0 %v440
  %1004 = vmatprep.subr.bf16.mxu0 0
  %1005 = vmatpush1.bf16.msra.mxu0 %v439
  %1006 = vmatprep.subr.bf16.mxu0 0
  %1007 = vmatpush2.bf16.msra.mxu0 0
  %1008 = vmatprep.subr.bf16.mxu0 0
  %1009 = vmatpush2.bf16.msra.mxu0 0
  %1010 = vmatprep.subr.bf16.mxu0 0
  %1011 = vmatpush2.bf16.msra.mxu0 0
  %1012 = vmatprep.subr.bf16.mxu0 0
  %1013 = vmatpush2.bf16.msra.mxu0 0
  %1014 = vmatprep.subr.bf16.mxu0 0
  %1015 = vmatpush2.bf16.msra.mxu0 0
  %1016 = vmatprep.subr.bf16.mxu0 0
  %1017 = vmatpush2.bf16.msra.mxu0 0
  %1018 = vmatprep.subr.bf16.mxu0 0
  %1019 = vmatpush2.bf16.msra.mxu0 0
  %1020 = vmatprep.subr.bf16.mxu0 0
  %1021 = vmatpush2.bf16.msra.mxu0 0
  %1022 = vmatprep.mubr.bf16.mxu0 0
  %1023 = vmatmul.mubr.bf16.gmra.mxu0 %v988
  %v1024 = vpop.f32.mrf.mxu0
  %v1025 = vadd.f32 %v288, %v1024
  %v1026 = vpop.f32.mrf.mxu0
  %v1027 = vpop.f32.mrf.mxu0
  %v1028 = vpop.f32.mrf.mxu0
  %1029 = vdwg.mxu0
  %v1030 = vxor.u32 %v1025, 2147483648
  %v1031 = vmul.f32 %v1030, 1.442695
  %v1032 = vpow.pop %v1031
  %v1033 = vadd.f32 %v1032, 1.0
  %v1034 = vrcp.pop %v1033
  %v1035 = vmul.f32 1.0, %v1034
  %v1036 = vmul.f32 %v1035, 2.0
  %v1037 = vsub.f32 %v1036, 1.0
  %v1038 = vmul.f32 %v1035, %v898
  %1040 = vrot.lane.b32.xlu0 %v1037, 64
  %v1041 = vpop.permute.xlu0 %1040
  %v1043 = vmul.f32 %v1035, %v1041
  %1045 = vrot.lane.b32.xlu0 %v1043, 32
  %v1046 = vpop.permute.xlu0 %1045
  %v1048 = vadd.f32 %v1038, %v1046
  %v1049 = vtanh.pop %v1048
  %1051 = vrot.lane.b32.xlu0 %v1049, 64
  %v1052 = vpop.permute.xlu0 %1051
  %v1054 = vmul.f32 %v1035, %v1052
  %1056 = vrot.lane.b32.xlu0 %v904, 32
  %v1057 = vpop.permute.xlu0 %1056
  %1060 = vrot.lane.b32.xlu0 %v982, 64
  %v1061 = vpop.permute.xlu0 %1060
  %v1063 = vsel %vm443, %v1057, %v1061
  %v1064 = vpack.c.bf16 %v1063, %v1063
  %v1066 = vsel %vm614, %v1064, 0
  %1068 = vmatprep.subr.bf16.mxu0 0
  %1069 = vmatpush1.bf16.msra.mxu0 0
  %1070 = vmatprep.subr.bf16.mxu0 0
  %1071 = vmatpush1.bf16.msra.mxu0 0
  %1072 = vmatprep.subr.bf16.mxu0 0
  %1073 = vmatpush1.bf16.msra.mxu0 0
  %1074 = vmatprep.subr.bf16.mxu0 0
  %1075 = vmatpush1.bf16.msra.mxu0 0
  %1076 = vmatprep.subr.bf16.mxu0 0
  %1077 = vmatpush1.bf16.msra.mxu0 %v609
  %1078 = vmatprep.subr.bf16.mxu0 0
  %1079 = vmatpush1.bf16.msra.mxu0 %v608
  %1080 = vmatprep.subr.bf16.mxu0 0
  %1081 = vmatpush1.bf16.msra.mxu0 %v607
  %1082 = vmatprep.subr.bf16.mxu0 0
  %1083 = vmatpush1.bf16.msra.mxu0 %v606
  %1084 = vmatprep.subr.bf16.mxu0 0
  %1085 = vmatpush2.bf16.msra.mxu0 0
  %1086 = vmatprep.subr.bf16.mxu0 0
  %1087 = vmatpush2.bf16.msra.mxu0 0
  %1088 = vmatprep.subr.bf16.mxu0 0
  %1089 = vmatpush2.bf16.msra.mxu0 0
  %1090 = vmatprep.subr.bf16.mxu0 0
  %1091 = vmatpush2.bf16.msra.mxu0 0
  %1092 = vmatprep.subr.bf16.mxu0 0
  %1093 = vmatpush2.bf16.msra.mxu0 0
  %1094 = vmatprep.subr.bf16.mxu0 0
  %1095 = vmatpush2.bf16.msra.mxu0 0
  %1096 = vmatprep.subr.bf16.mxu0 0
  %1097 = vmatpush2.bf16.msra.mxu0 0
  %1098 = vmatprep.subr.bf16.mxu0 0
  %1099 = vmatpush2.bf16.msra.mxu0 0
  %1100 = vmatprep.mubr.bf16.mxu0 0
  %1101 = vmatmul.mubr.bf16.gmra.mxu0 %v1066
  %v1102 = vpop.f32.mrf.mxu0
  %v1103 = vadd.f32 %v57, %v1102
  %v1104 = vpop.f32.mrf.mxu0
  %v1105 = vpop.f32.mrf.mxu0
  %v1106 = vpop.f32.mrf.mxu0
  %1107 = vdwg.mxu0
  %v1108 = vxor.u32 %v1103, 2147483648
  %v1109 = vmul.f32 %v1108, 1.442695
  %v1110 = vpow.pop %v1109
  %v1111 = vadd.f32 %v1110, 1.0
  %v1112 = vrcp.pop %v1111
  %v1113 = vmul.f32 1.0, %v1112
  %v1114 = vmul.f32 %v1113, 2.0
  %v1115 = vsub.f32 %v1114, 1.0
  %v1116 = vmul.f32 %v1113, %v976
  %1118 = vrot.lane.b32.xlu0 %v1115, 64
  %v1119 = vpop.permute.xlu0 %1118
  %v1121 = vmul.f32 %v1113, %v1119
  %1123 = vrot.lane.b32.xlu0 %v1121, 32
  %v1124 = vpop.permute.xlu0 %1123
  %v1126 = vadd.f32 %v1116, %v1124
  %v1127 = vtanh.pop %v1126
  %1129 = vrot.lane.b32.xlu0 %v1127, 64
  %v1130 = vpop.permute.xlu0 %1129
  %v1132 = vmul.f32 %v1113, %v1130
  %v1133 = vpack.c.bf16 %v1054, %v1054
  %1135 = vrot.lane.b32.xlu0 %v1133, 32
  %v1136 = vpop.permute.xlu0 %1135
  %v1138 = vsel %vm443, %v1136, 0
  %1140 = vmatprep.subr.bf16.mxu0 0
  %1141 = vmatpush1.bf16.msra.mxu0 0
  %1142 = vmatprep.subr.bf16.mxu0 0
  %1143 = vmatpush1.bf16.msra.mxu0 0
  %1144 = vmatprep.subr.bf16.mxu0 0
  %1145 = vmatpush1.bf16.msra.mxu0 0
  %1146 = vmatprep.subr.bf16.mxu0 0
  %1147 = vmatpush1.bf16.msra.mxu0 0
  %1148 = vmatprep.subr.bf16.mxu0 0
  %1149 = vmatpush1.bf16.msra.mxu0 0
  %1150 = vmatprep.subr.bf16.mxu0 0
  %1151 = vmatpush1.bf16.msra.mxu0 0
  %1152 = vmatprep.subr.bf16.mxu0 0
  %1153 = vmatpush1.bf16.msra.mxu0 %v440
  %1154 = vmatprep.subr.bf16.mxu0 0
  %1155 = vmatpush1.bf16.msra.mxu0 %v439
  %1156 = vmatprep.subr.bf16.mxu0 0
  %1157 = vmatpush2.bf16.msra.mxu0 0
  %1158 = vmatprep.subr.bf16.mxu0 0
  %1159 = vmatpush2.bf16.msra.mxu0 0
  %1160 = vmatprep.subr.bf16.mxu0 0
  %1161 = vmatpush2.bf16.msra.mxu0 0
  %1162 = vmatprep.subr.bf16.mxu0 0
  %1163 = vmatpush2.bf16.msra.mxu0 0
  %1164 = vmatprep.subr.bf16.mxu0 0
  %1165 = vmatpush2.bf16.msra.mxu0 0
  %1166 = vmatprep.subr.bf16.mxu0 0
  %1167 = vmatpush2.bf16.msra.mxu0 0
  %1168 = vmatprep.subr.bf16.mxu0 0
  %1169 = vmatpush2.bf16.msra.mxu0 0
  %1170 = vmatprep.subr.bf16.mxu0 0
  %1171 = vmatpush2.bf16.msra.mxu0 0
  %1172 = vmatprep.mubr.bf16.mxu0 0
  %1173 = vmatmul.mubr.bf16.gmra.mxu0 %v1138
  %v1174 = vpop.f32.mrf.mxu0
  %v1175 = vadd.f32 %v334, %v1174
  %v1176 = vpop.f32.mrf.mxu0
  %v1177 = vpop.f32.mrf.mxu0
  %v1178 = vpop.f32.mrf.mxu0
  %1179 = vdwg.mxu0
  %v1180 = vxor.u32 %v1175, 2147483648
  %v1181 = vmul.f32 %v1180, 1.442695
  %v1182 = vpow.pop %v1181
  %v1183 = vadd.f32 %v1182, 1.0
  %v1184 = vrcp.pop %v1183
  %v1185 = vmul.f32 1.0, %v1184
  %v1186 = vmul.f32 %v1185, 2.0
  %v1187 = vsub.f32 %v1186, 1.0
  %v1188 = vmul.f32 %v1185, %v1048
  %1190 = vrot.lane.b32.xlu0 %v1187, 64
  %v1191 = vpop.permute.xlu0 %1190
  %v1193 = vmul.f32 %v1185, %v1191
  %1195 = vrot.lane.b32.xlu0 %v1193, 32
  %v1196 = vpop.permute.xlu0 %1195
  %v1198 = vadd.f32 %v1188, %v1196
  %v1199 = vtanh.pop %v1198
  %1201 = vrot.lane.b32.xlu0 %v1199, 64
  %v1202 = vpop.permute.xlu0 %1201
  %v1204 = vmul.f32 %v1185, %v1202
  %1206 = vrot.lane.b32.xlu0 %v1054, 32
  %v1207 = vpop.permute.xlu0 %1206
  %1210 = vrot.lane.b32.xlu0 %v1132, 64
  %v1211 = vpop.permute.xlu0 %1210
  %v1213 = vsel %vm443, %v1207, %v1211
  %v1214 = vpack.c.bf16 %v1213, %v1213
  %v1216 = vsel %vm614, %v1214, 0
  %1218 = vmatprep.subr.bf16.mxu0 0
  %1219 = vmatpush1.bf16.msra.mxu0 0
  %1220 = vmatprep.subr.bf16.mxu0 0
  %1221 = vmatpush1.bf16.msra.mxu0 0
  %1222 = vmatprep.subr.bf16.mxu0 0
  %1223 = vmatpush1.bf16.msra.mxu0 0
  %1224 = vmatprep.subr.bf16.mxu0 0
  %1225 = vmatpush1.bf16.msra.mxu0 0
  %1226 = vmatprep.subr.bf16.mxu0 0
  %1227 = vmatpush1.bf16.msra.mxu0 %v609
  %1228 = vmatprep.subr.bf16.mxu0 0
  %1229 = vmatpush1.bf16.msra.mxu0 %v608
  %1230 = vmatprep.subr.bf16.mxu0 0
  %1231 = vmatpush1.bf16.msra.mxu0 %v607
  %1232 = vmatprep.subr.bf16.mxu0 0
  %1233 = vmatpush1.bf16.msra.mxu0 %v606
  %1234 = vmatprep.subr.bf16.mxu0 0
  %1235 = vmatpush2.bf16.msra.mxu0 0
  %1236 = vmatprep.subr.bf16.mxu0 0
  %1237 = vmatpush2.bf16.msra.mxu0 0
  %1238 = vmatprep.subr.bf16.mxu0 0
  %1239 = vmatpush2.bf16.msra.mxu0 0
  %1240 = vmatprep.subr.bf16.mxu0 0
  %1241 = vmatpush2.bf16.msra.mxu0 0
  %1242 = vmatprep.subr.bf16.mxu0 0
  %1243 = vmatpush2.bf16.msra.mxu0 0
  %1244 = vmatprep.subr.bf16.mxu0 0
  %1245 = vmatpush2.bf16.msra.mxu0 0
  %1246 = vmatprep.subr.bf16.mxu0 0
  %1247 = vmatpush2.bf16.msra.mxu0 0
  %1248 = vmatprep.subr.bf16.mxu0 0
  %1249 = vmatpush2.bf16.msra.mxu0 0
  %1250 = vmatprep.mubr.bf16.mxu0 0
  %1251 = vmatmul.mubr.bf16.gmra.mxu0 %v1216
  %v1252 = vpop.f32.mrf.mxu0
  %v1253 = vadd.f32 %v57, %v1252
  %v1254 = vpop.f32.mrf.mxu0
  %v1255 = vpop.f32.mrf.mxu0
  %v1256 = vpop.f32.mrf.mxu0
  %1257 = vdwg.mxu0
  %v1258 = vxor.u32 %v1253, 2147483648
  %v1259 = vmul.f32 %v1258, 1.442695
  %v1260 = vpow.pop %v1259
  %v1261 = vadd.f32 %v1260, 1.0
  %v1262 = vrcp.pop %v1261
  %v1263 = vmul.f32 1.0, %v1262
  %v1264 = vmul.f32 %v1263, 2.0
  %v1265 = vsub.f32 %v1264, 1.0
  %v1266 = vmul.f32 %v1263, %v1126
  %1268 = vrot.lane.b32.xlu0 %v1265, 64
  %v1269 = vpop.permute.xlu0 %1268
  %v1271 = vmul.f32 %v1263, %v1269
  %1273 = vrot.lane.b32.xlu0 %v1271, 32
  %v1274 = vpop.permute.xlu0 %1273
  %v1276 = vadd.f32 %v1266, %v1274
  %v1277 = vtanh.pop %v1276
  %1279 = vrot.lane.b32.xlu0 %v1277, 64
  %v1280 = vpop.permute.xlu0 %1279
  %v1282 = vmul.f32 %v1263, %v1280
  %v1283 = vpack.c.bf16 %v1204, %v1204
  %1285 = vrot.lane.b32.xlu0 %v1283, 32
  %v1286 = vpop.permute.xlu0 %1285
  %v1288 = vsel %vm443, %v1286, 0
  %1290 = vmatprep.subr.bf16.mxu0 0
  %1291 = vmatpush1.bf16.msra.mxu0 0
  %1292 = vmatprep.subr.bf16.mxu0 0
  %1293 = vmatpush1.bf16.msra.mxu0 0
  %1294 = vmatprep.subr.bf16.mxu0 0
  %1295 = vmatpush1.bf16.msra.mxu0 0
  %1296 = vmatprep.subr.bf16.mxu0 0
  %1297 = vmatpush1.bf16.msra.mxu0 0
  %1298 = vmatprep.subr.bf16.mxu0 0
  %1299 = vmatpush1.bf16.msra.mxu0 0
  %1300 = vmatprep.subr.bf16.mxu0 0
  %1301 = vmatpush1.bf16.msra.mxu0 0
  %1302 = vmatprep.subr.bf16.mxu0 0
  %1303 = vmatpush1.bf16.msra.mxu0 %v440
  %1304 = vmatprep.subr.bf16.mxu0 0
  %1305 = vmatpush1.bf16.msra.mxu0 %v439
  %1306 = vmatprep.subr.bf16.mxu0 0
  %1307 = vmatpush2.bf16.msra.mxu0 0
  %1308 = vmatprep.subr.bf16.mxu0 0
  %1309 = vmatpush2.bf16.msra.mxu0 0
  %1310 = vmatprep.subr.bf16.mxu0 0
  %1311 = vmatpush2.bf16.msra.mxu0 0
  %1312 = vmatprep.subr.bf16.mxu0 0
  %1313 = vmatpush2.bf16.msra.mxu0 0
  %1314 = vmatprep.subr.bf16.mxu0 0
  %1315 = vmatpush2.bf16.msra.mxu0 0
  %1316 = vmatprep.subr.bf16.mxu0 0
  %1317 = vmatpush2.bf16.msra.mxu0 0
  %1318 = vmatprep.subr.bf16.mxu0 0
  %1319 = vmatpush2.bf16.msra.mxu0 0
  %1320 = vmatprep.subr.bf16.mxu0 0
  %1321 = vmatpush2.bf16.msra.mxu0 0
  %1322 = vmatprep.mubr.bf16.mxu0 0
  %1323 = vmatmul.mubr.bf16.gmra.mxu0 %v1288
  %v1324 = vpop.f32.mrf.mxu0
  %v1325 = vadd.f32 %v380, %v1324
  %v1326 = vpop.f32.mrf.mxu0
  %v1327 = vpop.f32.mrf.mxu0
  %v1328 = vpop.f32.mrf.mxu0
  %1329 = vdwg.mxu0
  %v1330 = vxor.u32 %v1325, 2147483648
  %v1331 = vmul.f32 %v1330, 1.442695
  %v1332 = vpow.pop %v1331
  %v1333 = vadd.f32 %v1332, 1.0
  %v1334 = vrcp.pop %v1333
  %v1335 = vmul.f32 1.0, %v1334
  %v1336 = vmul.f32 %v1335, 2.0
  %v1337 = vsub.f32 %v1336, 1.0
  %v1338 = vmul.f32 %v1335, %v1198
  %1340 = vrot.lane.b32.xlu0 %v1337, 64
  %v1341 = vpop.permute.xlu0 %1340
  %v1343 = vmul.f32 %v1335, %v1341
  %1345 = vrot.lane.b32.xlu0 %v1343, 32
  %v1346 = vpop.permute.xlu0 %1345
  %v1348 = vadd.f32 %v1338, %v1346
  %v1349 = vtanh.pop %v1348
  %1351 = vrot.lane.b32.xlu0 %v1349, 64
  %v1352 = vpop.permute.xlu0 %1351
  %v1354 = vmul.f32 %v1335, %v1352
  %1356 = vrot.lane.b32.xlu0 %v1204, 32
  %v1357 = vpop.permute.xlu0 %1356
  %1360 = vrot.lane.b32.xlu0 %v1282, 64
  %v1361 = vpop.permute.xlu0 %1360
  %v1363 = vsel %vm443, %v1357, %v1361
  %v1364 = vpack.c.bf16 %v1363, %v1363
  %v1366 = vsel %vm614, %v1364, 0
  %1368 = vmatprep.subr.bf16.mxu0 0
  %1369 = vmatpush1.bf16.msra.mxu0 0
  %1370 = vmatprep.subr.bf16.mxu0 0
  %1371 = vmatpush1.bf16.msra.mxu0 0
  %1372 = vmatprep.subr.bf16.mxu0 0
  %1373 = vmatpush1.bf16.msra.mxu0 0
  %1374 = vmatprep.subr.bf16.mxu0 0
  %1375 = vmatpush1.bf16.msra.mxu0 0
  %1376 = vmatprep.subr.bf16.mxu0 0
  %1377 = vmatpush1.bf16.msra.mxu0 %v609
  %1378 = vmatprep.subr.bf16.mxu0 0
  %1379 = vmatpush1.bf16.msra.mxu0 %v608
  %1380 = vmatprep.subr.bf16.mxu0 0
  %1381 = vmatpush1.bf16.msra.mxu0 %v607
  %1382 = vmatprep.subr.bf16.mxu0 0
  %1383 = vmatpush1.bf16.msra.mxu0 %v606
  %1384 = vmatprep.subr.bf16.mxu0 0
  %1385 = vmatpush2.bf16.msra.mxu0 0
  %1386 = vmatprep.subr.bf16.mxu0 0
  %1387 = vmatpush2.bf16.msra.mxu0 0
  %1388 = vmatprep.subr.bf16.mxu0 0
  %1389 = vmatpush2.bf16.msra.mxu0 0
  %1390 = vmatprep.subr.bf16.mxu0 0
  %1391 = vmatpush2.bf16.msra.mxu0 0
  %1392 = vmatprep.subr.bf16.mxu0 0
  %1393 = vmatpush2.bf16.msra.mxu0 0
  %1394 = vmatprep.subr.bf16.mxu0 0
  %1395 = vmatpush2.bf16.msra.mxu0 0
  %1396 = vmatprep.subr.bf16.mxu0 0
  %1397 = vmatpush2.bf16.msra.mxu0 0
  %1398 = vmatprep.subr.bf16.mxu0 0
  %1399 = vmatpush2.bf16.msra.mxu0 0
  %1400 = vmatprep.mubr.bf16.mxu0 0
  %1401 = vmatmul.mubr.bf16.gmra.mxu0 %v1366
  %v1402 = vpop.f32.mrf.mxu0
  %v1403 = vadd.f32 %v57, %v1402
  %v1404 = vpop.f32.mrf.mxu0
  %v1405 = vpop.f32.mrf.mxu0
  %v1406 = vpop.f32.mrf.mxu0
  %1407 = vdwg.mxu0
  %v1408 = vxor.u32 %v1403, 2147483648
  %v1409 = vmul.f32 %v1408, 1.442695
  %v1410 = vpow.pop %v1409
  %v1411 = vadd.f32 %v1410, 1.0
  %v1412 = vrcp.pop %v1411
  %v1413 = vmul.f32 1.0, %v1412
  %v1414 = vmul.f32 %v1413, 2.0
  %v1415 = vsub.f32 %v1414, 1.0
  %v1416 = vmul.f32 %v1413, %v1276
  %1418 = vrot.lane.b32.xlu0 %v1415, 64
  %v1419 = vpop.permute.xlu0 %1418
  %v1421 = vmul.f32 %v1413, %v1419
  %1423 = vrot.lane.b32.xlu0 %v1421, 32
  %v1424 = vpop.permute.xlu0 %1423
  %v1426 = vadd.f32 %v1416, %v1424
  %v1427 = vtanh.pop %v1426
  %1429 = vrot.lane.b32.xlu0 %v1427, 64
  %v1430 = vpop.permute.xlu0 %1429
  %v1432 = vmul.f32 %v1413, %v1430
  %v1433 = vpack.c.bf16 %v1354, %v1354
  %1435 = vrot.lane.b32.xlu0 %v1433, 32
  %v1436 = vpop.permute.xlu0 %1435
  %v1438 = vsel %vm443, %v1436, 0
  %1440 = vmatprep.subr.bf16.mxu0 0
  %1441 = vmatpush1.bf16.msra.mxu0 0
  %1442 = vmatprep.subr.bf16.mxu0 0
  %1443 = vmatpush1.bf16.msra.mxu0 0
  %1444 = vmatprep.subr.bf16.mxu0 0
  %1445 = vmatpush1.bf16.msra.mxu0 0
  %1446 = vmatprep.subr.bf16.mxu0 0
  %1447 = vmatpush1.bf16.msra.mxu0 0
  %1448 = vmatprep.subr.bf16.mxu0 0
  %1449 = vmatpush1.bf16.msra.mxu0 0
  %1450 = vmatprep.subr.bf16.mxu0 0
  %1451 = vmatpush1.bf16.msra.mxu0 0
  %1452 = vmatprep.subr.bf16.mxu0 0
  %1453 = vmatpush1.bf16.msra.mxu0 %v440
  %1454 = vmatprep.subr.bf16.mxu0 0
  %1455 = vmatpush1.bf16.msra.mxu0 %v439
  %1456 = vmatprep.subr.bf16.mxu0 0
  %1457 = vmatpush2.bf16.msra.mxu0 0
  %1458 = vmatprep.subr.bf16.mxu0 0
  %1459 = vmatpush2.bf16.msra.mxu0 0
  %1460 = vmatprep.subr.bf16.mxu0 0
  %1461 = vmatpush2.bf16.msra.mxu0 0
  %1462 = vmatprep.subr.bf16.mxu0 0
  %1463 = vmatpush2.bf16.msra.mxu0 0
  %1464 = vmatprep.subr.bf16.mxu0 0
  %1465 = vmatpush2.bf16.msra.mxu0 0
  %1466 = vmatprep.subr.bf16.mxu0 0
  %1467 = vmatpush2.bf16.msra.mxu0 0
  %1468 = vmatprep.subr.bf16.mxu0 0
  %1469 = vmatpush2.bf16.msra.mxu0 0
  %1470 = vmatprep.subr.bf16.mxu0 0
  %1471 = vmatpush2.bf16.msra.mxu0 0
  %1472 = vmatprep.mubr.bf16.mxu0 0
  %1473 = vmatmul.mubr.bf16.gmra.mxu0 %v1438
  %v1474 = vpop.f32.mrf.mxu0
  %v1475 = vadd.f32 %v426, %v1474
  %v1476 = vpop.f32.mrf.mxu0
  %v1477 = vpop.f32.mrf.mxu0
  %v1478 = vpop.f32.mrf.mxu0
  %1479 = vdwg.mxu0
  %v1480 = vxor.u32 %v1475, 2147483648
  %v1481 = vmul.f32 %v1480, 1.442695
  %v1482 = vpow.pop %v1481
  %v1483 = vadd.f32 %v1482, 1.0
  %v1484 = vrcp.pop %v1483
  %v1485 = vmul.f32 1.0, %v1484
  %v1486 = vmul.f32 %v1485, 2.0
  %v1487 = vsub.f32 %v1486, 1.0
  %v1488 = vmul.f32 %v1485, %v1348
  %1490 = vrot.lane.b32.xlu0 %v1487, 64
  %v1491 = vpop.permute.xlu0 %1490
  %v1493 = vmul.f32 %v1485, %v1491
  %1495 = vrot.lane.b32.xlu0 %v1493, 32
  %v1496 = vpop.permute.xlu0 %1495
  %v1498 = vadd.f32 %v1488, %v1496
  %v1499 = vtanh.pop %v1498
  %1501 = vrot.lane.b32.xlu0 %v1499, 64
  %v1502 = vpop.permute.xlu0 %1501
  %v1504 = vmul.f32 %v1485, %v1502
  %1506 = vrot.lane.b32.xlu0 %v1354, 32
  %v1507 = vpop.permute.xlu0 %1506
  %1510 = vrot.lane.b32.xlu0 %v1432, 64
  %v1511 = vpop.permute.xlu0 %1510
  %v1513 = vsel %vm443, %v1507, %v1511
  %v1514 = vpack.c.bf16 %v1513, %v1513
  %v1516 = vsel %vm614, %v1514, 0
  %1518 = vmatprep.subr.bf16.mxu0 0
  %1519 = vmatpush1.bf16.msra.mxu0 0
  %1520 = vmatprep.subr.bf16.mxu0 0
  %1521 = vmatpush1.bf16.msra.mxu0 0
  %1522 = vmatprep.subr.bf16.mxu0 0
  %1523 = vmatpush1.bf16.msra.mxu0 0
  %1524 = vmatprep.subr.bf16.mxu0 0
  %1525 = vmatpush1.bf16.msra.mxu0 0
  %1526 = vmatprep.subr.bf16.mxu0 0
  %1527 = vmatpush1.bf16.msra.mxu0 %v609
  %1528 = vmatprep.subr.bf16.mxu0 0
  %1529 = vmatpush1.bf16.msra.mxu0 %v608
  %1530 = vmatprep.subr.bf16.mxu0 0
  %1531 = vmatpush1.bf16.msra.mxu0 %v607
  %1532 = vmatprep.subr.bf16.mxu0 0
  %1533 = vmatpush1.bf16.msra.mxu0 %v606
  %1534 = vmatprep.subr.bf16.mxu0 0
  %1535 = vmatpush2.bf16.msra.mxu0 0
  %1536 = vmatprep.subr.bf16.mxu0 0
  %1537 = vmatpush2.bf16.msra.mxu0 0
  %1538 = vmatprep.subr.bf16.mxu0 0
  %1539 = vmatpush2.bf16.msra.mxu0 0
  %1540 = vmatprep.subr.bf16.mxu0 0
  %1541 = vmatpush2.bf16.msra.mxu0 0
  %1542 = vmatprep.subr.bf16.mxu0 0
  %1543 = vmatpush2.bf16.msra.mxu0 0
  %1544 = vmatprep.subr.bf16.mxu0 0
  %1545 = vmatpush2.bf16.msra.mxu0 0
  %1546 = vmatprep.subr.bf16.mxu0 0
  %1547 = vmatpush2.bf16.msra.mxu0 0
  %1548 = vmatprep.subr.bf16.mxu0 0
  %1549 = vmatpush2.bf16.msra.mxu0 0
  %1550 = vmatprep.mubr.bf16.mxu0 0
  %1551 = vmatmul.mubr.bf16.gmra.mxu0 %v1516
  %v1552 = vpop.f32.mrf.mxu0
  %v1553 = vadd.f32 %v57, %v1552
  %v1554 = vpop.f32.mrf.mxu0
  %v1555 = vpop.f32.mrf.mxu0
  %v1556 = vpop.f32.mrf.mxu0
  %1557 = vdwg.mxu0
  %v1558 = vxor.u32 %v1553, 2147483648
  %v1559 = vmul.f32 %v1558, 1.442695
  %v1560 = vpow.pop %v1559
  %v1561 = vadd.f32 %v1560, 1.0
  %v1562 = vrcp.pop %v1561
  %v1563 = vmul.f32 1.0, %v1562
  %v1564 = vmul.f32 %v1563, 2.0
  %v1565 = vsub.f32 %v1564, 1.0
  %v1566 = vmul.f32 %v1563, %v1426
  %1568 = vrot.lane.b32.xlu0 %v1565, 64
  %v1569 = vpop.permute.xlu0 %1568
  %v1571 = vmul.f32 %v1563, %v1569
  %1573 = vrot.lane.b32.xlu0 %v1571, 32
  %v1574 = vpop.permute.xlu0 %1573
  %v1576 = vadd.f32 %v1566, %v1574
  %v1577 = vtanh.pop %v1576
  %1579 = vrot.lane.b32.xlu0 %v1577, 64
  %v1580 = vpop.permute.xlu0 %1579
  %v1582 = vmul.f32 %v1563, %v1580
  %1584 = vrot.lane.b32.xlu0 %v1504, 32
  %v1585 = vpop.permute.xlu0 %1584
  %1588 = vrot.lane.b32.xlu0 %v1582, 64
  %v1589 = vpop.permute.xlu0 %1588
  %v1591 = vsel %vm443, %v1585, %v1589
  %v1592 = vpack.c.bf16 %v1591, %v1591
  %v1594 = vsel %vm614, %v1592, 0
  %1596 = vmatprep.subr.bf16.mxu0 0
  %1597 = vmatpush1.bf16.msra.mxu0 0
  %1598 = vmatprep.subr.bf16.mxu0 0
  %1599 = vmatpush1.bf16.msra.mxu0 0
  %1600 = vmatprep.subr.bf16.mxu0 0
  %1601 = vmatpush1.bf16.msra.mxu0 0
  %1602 = vmatprep.subr.bf16.mxu0 0
  %1603 = vmatpush1.bf16.msra.mxu0 0
  %1604 = vmatprep.subr.bf16.mxu0 0
  %1605 = vmatpush1.bf16.msra.mxu0 %v609
  %1606 = vmatprep.subr.bf16.mxu0 0
  %1607 = vmatpush1.bf16.msra.mxu0 %v608
  %1608 = vmatprep.subr.bf16.mxu0 0
  %1609 = vmatpush1.bf16.msra.mxu0 %v607
  %1610 = vmatprep.subr.bf16.mxu0 0
  %1611 = vmatpush1.bf16.msra.mxu0 %v606
  %1612 = vmatprep.subr.bf16.mxu0 0
  %1613 = vmatpush2.bf16.msra.mxu0 0
  %1614 = vmatprep.subr.bf16.mxu0 0
  %1615 = vmatpush2.bf16.msra.mxu0 0
  %1616 = vmatprep.subr.bf16.mxu0 0
  %1617 = vmatpush2.bf16.msra.mxu0 0
  %1618 = vmatprep.subr.bf16.mxu0 0
  %1619 = vmatpush2.bf16.msra.mxu0 0
  %1620 = vmatprep.subr.bf16.mxu0 0
  %1621 = vmatpush2.bf16.msra.mxu0 0
  %1622 = vmatprep.subr.bf16.mxu0 0
  %1623 = vmatpush2.bf16.msra.mxu0 0
  %1624 = vmatprep.subr.bf16.mxu0 0
  %1625 = vmatpush2.bf16.msra.mxu0 0
  %1626 = vmatprep.subr.bf16.mxu0 0
  %1627 = vmatpush2.bf16.msra.mxu0 0
  %1628 = vmatprep.mubr.bf16.mxu0 0
  %1629 = vmatmul.mubr.bf16.gmra.mxu0 %v1594
  %v1630 = vpop.f32.mrf.mxu0
  %v1631 = vadd.f32 %v57, %v1630
  %v1632 = vpop.f32.mrf.mxu0
  %v1633 = vpop.f32.mrf.mxu0
  %v1634 = vpop.f32.mrf.mxu0
  %1635 = vdwg.mxu0
  %v1636 = vxor.u32 %v1631, 2147483648
  %v1637 = vmul.f32 %v1636, 1.442695
  %v1638 = vpow.pop %v1637
  %v1639 = vadd.f32 %v1638, 1.0
  %v1640 = vrcp.pop %v1639
  %v1641 = vmul.f32 1.0, %v1640
  %v1642 = vmul.f32 %v1641, 2.0
  %v1643 = vsub.f32 %v1642, 1.0
  %v1644 = vmul.f32 %v1641, %v1576
  %1646 = vrot.lane.b32.xlu0 %v1643, 64
  %v1647 = vpop.permute.xlu0 %1646
  %v1649 = vmul.f32 %v1641, %v1647
  %1651 = vrot.lane.b32.xlu0 %v1649, 32
  %v1652 = vpop.permute.xlu0 %1651
  %v1654 = vadd.f32 %v1644, %v1652
  %v1655 = vtanh.pop %v1654
  %1657 = vrot.lane.b32.xlu0 %v1655, 64
  %v1658 = vpop.permute.xlu0 %1657
  %v1660 = vmul.f32 %v1641, %v1658
  %v1661 = vld [vmem:[%s6] sm:$0xff]
  %v1662 = vld [vmem:[%s6 + $0x8] sm:$0xff]
  %v1663 = vld [vmem:[%s6 + $0x10] sm:$0xff]
  %v1664 = vld [vmem:[%s6 + $0x18] sm:$0xff]
  %v1665 = vld [vmem:[#allocation2] sm:$0x1]
  %v1667 = vlaneseq
  %v1668 = vshrl.u32 %v1667, 7
  %v1669 = vsub.s32 0, %v1668
  %v1670 = vrot.slane %v1665, %v1669
  %1673 = vrot.lane.b32.xlu0 %v1660, 32
  %v1674 = vpop.permute.xlu0 %1673
  %v1675 = vsel %vm443, %v1674, 0
  %1677 = vmatprep.subr.mxu0 0.0
  %1678 = vmatpush1.msra.mxu0 0.0
  %1679 = vmatprep.subr.mxu0 0.0
  %1680 = vmatpush1.msra.mxu0 0.0
  %1681 = vmatprep.subr.mxu0 0.0
  %1682 = vmatpush1.msra.mxu0 0.0
  %1683 = vmatprep.subr.mxu0 0.0
  %1684 = vmatpush1.msra.mxu0 0.0
  %1685 = vmatprep.subr.mxu0 0.0
  %1686 = vmatpush1.msra.mxu0 0.0
  %1687 = vmatprep.subr.mxu0 0.0
  %1688 = vmatpush1.msra.mxu0 0.0
  %1689 = vmatprep.subr.mxu0 0.0
  %1690 = vmatpush1.msra.mxu0 0.0
  %1691 = vmatprep.subr.mxu0 0.0
  %1692 = vmatpush1.msra.mxu0 0.0
  %1693 = vmatprep.subr.mxu0 0.0
  %1694 = vmatpush1.msra.mxu0 0.0
  %1695 = vmatprep.subr.mxu0 0.0
  %1696 = vmatpush1.msra.mxu0 0.0
  %1697 = vmatprep.subr.mxu0 0.0
  %1698 = vmatpush1.msra.mxu0 0.0
  %1699 = vmatprep.subr.mxu0 0.0
  %1700 = vmatpush1.msra.mxu0 0.0
  %1701 = vmatprep.subr.mxu0 0.0
  %1702 = vmatpush1.msra.mxu0 %v1664
  %1703 = vmatprep.subr.mxu0 0.0
  %1704 = vmatpush1.msra.mxu0 %v1663
  %1705 = vmatprep.subr.mxu0 0.0
  %1706 = vmatpush1.msra.mxu0 %v1662
  %1707 = vmatprep.subr.mxu0 0.0
  %1708 = vmatpush1.msra.mxu0 %v1661
  %1709 = vmatprep.subr.mxu0 0.0
  %1710 = vmatpush2.msra.mxu0 0.0
  %1711 = vmatprep.subr.mxu0 0.0
  %1712 = vmatpush2.msra.mxu0 0.0
  %1713 = vmatprep.subr.mxu0 0.0
  %1714 = vmatpush2.msra.mxu0 0.0
  %1715 = vmatprep.subr.mxu0 0.0
  %1716 = vmatpush2.msra.mxu0 0.0
  %1717 = vmatprep.subr.mxu0 0.0
  %1718 = vmatpush2.msra.mxu0 0.0
  %1719 = vmatprep.subr.mxu0 0.0
  %1720 = vmatpush2.msra.mxu0 0.0
  %1721 = vmatprep.subr.mxu0 0.0
  %1722 = vmatpush2.msra.mxu0 0.0
  %1723 = vmatprep.subr.mxu0 0.0
  %1724 = vmatpush2.msra.mxu0 0.0
  %1725 = vmatprep.subr.mxu0 0.0
  %1726 = vmatpush2.msra.mxu0 0.0
  %1727 = vmatprep.subr.mxu0 0.0
  %1728 = vmatpush2.msra.mxu0 0.0
  %1729 = vmatprep.subr.mxu0 0.0
  %1730 = vmatpush2.msra.mxu0 0.0
  %1731 = vmatprep.subr.mxu0 0.0
  %1732 = vmatpush2.msra.mxu0 0.0
  %1733 = vmatprep.subr.mxu0 0.0
  %1734 = vmatpush2.msra.mxu0 0.0
  %1735 = vmatprep.subr.mxu0 0.0
  %1736 = vmatpush2.msra.mxu0 0.0
  %1737 = vmatprep.subr.mxu0 0.0
  %1738 = vmatpush2.msra.mxu0 0.0
  %1739 = vmatprep.subr.mxu0 0.0
  %1740 = vmatpush2.msra.mxu0 0.0
  %1741 = vmatprep.mubr.f32.mxu0 0.0
  %1742 = vmatmul.mubr.f32.gmra.mxu0 %v1675
  %v1743 = vpop.f32.mrf.mxu0
  %v1744 = vadd.f32 %v1670, %v1743
  %v1745 = vpop.f32.mrf.mxu0
  %1746 = vdwg.mxu0
  %vm1747 = vcmask 7168
  %1748 = vst.msk [vmem:[%s8] sm:$0xff] %vm1747, %v1744
  // Predicated region
  $region34: #{tpu_custom_call.1} parent=0 // pred_check
    _
  $region35: #{tpu_custom_call.1} parent=0 // pred_check_branch
    %1750 = sbr.rel (0) target = $region37
  $region36: #{tpu_custom_call.1} parent=0 // pred_region
    _
  $region37: #{tpu_custom_call.1} parent=0 // pred_fallthru
    _
  // Predicated region
  $region38: #{tpu_custom_call.1} parent=0 // pred_check
    _
  $region39: #{tpu_custom_call.1} parent=0 // pred_check_branch
    %1752 = sbr.rel (0) target = $region41
  $region40: #{tpu_custom_call.1} parent=0 // pred_region
    _
  $region41: #{tpu_custom_call.1} parent=0 // pred_fallthru
    _

</llo_original>
